<compile_context>
chip_gen: v6e
topology: v6e:2x2x1
jax: 0.10.0
libtpu: 0.0.40
codegen_flags: <defaults>
</compile_context>

<pallas_src>
import functools

import jax
import jax.numpy as jnp
from jax.experimental import pallas as pl
from jax.experimental.pallas import tpu as pltpu


def gae_kernel(a_ref, x_ref,
               w1_ref, b1_ref, w2_ref, b2_ref,      # encoder
               w35_ref, b35_ref,                    # fused attr-dec conv1 | struct-dec conv
               w4_ref, b4_ref,                      # attr-dec conv2
               xhat_ref, ahat_ref,
               *, hidden_dim1):
    f32 = jnp.float32
    bf16 = jnp.bfloat16

    A = a_ref[...]          # bf16 [Np, Np]
    x = x_ref[...]          # bf16 [Np, F]

    def mm(a, b):
        return jnp.dot(a, b, preferred_element_type=f32)

    # ---- Encoder layer 1 (F -> h1, F_out > F_in): (A @ x) @ W1 + b1, relu ----
    ax = mm(A, x).astype(bf16)
    h1 = jnp.maximum(mm(ax, w1_ref[...]) + b1_ref[...], 0.0).astype(bf16)

    # ---- Encoder layer 2 (h1 -> h2, F_out < F_in): A @ (h1 @ W2) + b2, relu ----
    hw = mm(h1, w2_ref[...]).astype(bf16)
    z = jnp.maximum(mm(A, hw) + b2_ref[...], 0.0).astype(bf16)

    # ---- Fused attr-dec conv1 (h2 -> h1) + struct-dec conv (h2 -> h2):
    #      one (A @ z) @ [W3 | W5] + [b3 | b5], then slice (tile-aligned) + relu ----
    az = mm(A, z).astype(bf16)
    fused = mm(az, w35_ref[...]) + b35_ref[...]
    d1 = jnp.maximum(fused[:, :hidden_dim1], 0.0).astype(bf16)
    zs = jnp.maximum(fused[:, hidden_dim1:], 0.0).astype(bf16)

    # ---- Attr-dec conv2 (h1 -> F, F_out < F_in): A @ (d1 @ W4) + b4 ----
    dw = mm(d1, w4_ref[...]).astype(bf16)
    xhat_ref[...] = mm(A, dw) + b4_ref[...]

    # ---- Structure decoder: zs @ zs.T as a trans-B contraction (no explicit transpose) ----
    ahat_ref[...] = jax.lax.dot_general(
        zs, zs, dimension_numbers=(((1,), (1,)), ((), ())),
        preferred_element_type=f32)


def graph_autoencoder(a_norm, x, params, *, hidden_dim1):
    """Full forward pass. Returns (x_hat [N, input_dim], a_hat [N, N])."""
    N, F = x.shape
    (w1, b1, w2, b2, w3, b3, w4, b4, w5, b5) = params

    # Lane-dense padding: pad node count to a multiple of 128 so a_hat stores are unmasked
    # and every MXU tile is full width. Zero-padded rows/cols of A_norm cannot contaminate
    # the real rows, so slicing after the call is exact.
    Np = max(128, ((N + 127) // 128) * 128)
    if Np != N:
        a_norm = jnp.pad(a_norm, ((0, Np - N), (0, Np - N)))
        x = jnp.pad(x, ((0, Np - N), (0, 0)))

    # Fuse the two GCN layers that both consume z into one wide matmul.
    w35 = jnp.concatenate([w3, w5], axis=1)
    b35 = jnp.concatenate([b3, b5], axis=1)

    # bf16 MXU operands, f32 accumulation; biases stay f32.
    bf16 = jnp.bfloat16
    args = (a_norm.astype(bf16), x.astype(bf16),
            w1.astype(bf16), b1, w2.astype(bf16), b2,
            w35.astype(bf16), b35, w4.astype(bf16), b4)

    # Scoped-VMEM estimate: inputs + outputs + intermediates, with headroom, capped so the
    # request stays within physical VMEM on every chip generation (v7x has 64 MiB per TC).
    h1d = w1.shape[1]
    h2d = w2.shape[1]
    wide = h1d + h2d
    est = (Np * Np * (2 + 4)                      # A (bf16) + a_hat (f32)
           + Np * F * (2 + 4)                     # x (bf16) + x_hat (f32)
           + Np * (F + 2 * h1d + 3 * h2d + wide) * 4   # intermediates (f32 upper bound)
           + (F * h1d + h1d * h2d + h2d * wide + h1d * F) * 2
           + (h1d + h2d + wide + F) * 4)
    vmem_limit = int(min(64 * 1024 * 1024, max(32 * 1024 * 1024, 2 * est)))

    vmem = pl.BlockSpec(memory_space=pltpu.MemorySpace.VMEM)
    kernel = functools.partial(gae_kernel, hidden_dim1=hidden_dim1)
    x_hat, a_hat = pl.pallas_call(
        kernel,
        out_shape=(jax.ShapeDtypeStruct((Np, F), jnp.float32),
                   jax.ShapeDtypeStruct((Np, Np), jnp.float32)),
        in_specs=[vmem] * len(args),
        out_specs=(vmem, vmem),
        compiler_params=pltpu.CompilerParams(vmem_limit_bytes=vmem_limit),
    )(*args)
    return x_hat[:N], a_hat[:N, :N]


def _reference_f32(a_norm, x, params):
    """Pure-JAX f32 reference matching the torch module semantics."""
    (w1, b1, w2, b2, w3, b3, w4, b4, w5, b5) = params

    def gcn(h, w, b):
        return a_norm @ (h @ w) + b

    h1 = jnp.maximum(gcn(x, w1, b1), 0.0)
    z = jnp.maximum(gcn(h1, w2, b2), 0.0)
    d1 = jnp.maximum(gcn(z, w3, b3), 0.0)
    x_hat = gcn(d1, w4, b4)
    zs = jnp.maximum(gcn(z, w5, b5), 0.0)
    a_hat = zs @ zs.T
    return x_hat, a_hat


def _reference_mixed(a_norm, x, params, hidden_dim1):
    """Plain-JAX reference with the same bf16-input / f32-accumulate precision as the kernel."""
    (w1, b1, w2, b2, w3, b3, w4, b4, w5, b5) = params
    bf16, f32 = jnp.bfloat16, jnp.float32
    A = a_norm.astype(bf16)

    def mm(a, b):
        return jnp.dot(a.astype(bf16), b.astype(bf16), preferred_element_type=f32)

    w35 = jnp.concatenate([w3, w5], axis=1)
    b35 = jnp.concatenate([b3, b5], axis=1)

    h1 = jnp.maximum(mm(mm(A, x), w1) + b1, 0.0)
    z = jnp.maximum(mm(A, mm(h1, w2)) + b2, 0.0)
    fused = mm(mm(A, z), w35) + b35
    d1 = jnp.maximum(fused[:, :hidden_dim1], 0.0)
    zs = jnp.maximum(fused[:, hidden_dim1:], 0.0)
    x_hat = mm(A, mm(d1, w4)) + b4
    a_hat = mm(zs, zs.T)
    return x_hat, a_hat


if __name__ == "__main__":
    # Shapes consistent with the module spec (hidden_dim1=128, hidden_dim2=64), small graph.
    N, input_dim, hidden_dim1, hidden_dim2 = 200, 64, 128, 64

    key = jax.random.PRNGKey(0)
    k_x, k_e, k_w = jax.random.split(key, 3)

    # Node attributes
    x = jax.random.normal(k_x, (N, input_dim), jnp.float32)

    # Deterministic random edge_index (2, E)
    num_edges = 800
    src = jax.random.randint(k_e, (num_edges,), 0, N)
    dst = jax.random.randint(jax.random.fold_in(k_e, 1), (num_edges,), 0, N)
    edge_index = jnp.stack([src, dst])  # kept for fidelity with the torch signature

    # Glue: dense normalized adjacency  A_norm = D^{-1/2}(A + I)D^{-1/2}  (GCNConv normalization)
    A = jnp.zeros((N, N), jnp.float32).at[edge_index[0], edge_index[1]].set(1.0)
    A = jnp.maximum(A, A.T)                                   # undirected graph
    A = A.at[jnp.arange(N), jnp.arange(N)].set(1.0)           # add self loops
    deg = A.sum(axis=1)
    d_inv_sqrt = 1.0 / jnp.sqrt(deg)
    a_norm = A * d_inv_sqrt[:, None] * d_inv_sqrt[None, :]

    # Deterministic parameter init (glorot weights, zero biases — PyG GCNConv defaults)
    def glorot(k, fan_in, fan_out):
        lim = jnp.sqrt(6.0 / (fan_in + fan_out))
        return jax.random.uniform(k, (fan_in, fan_out), jnp.float32, -lim, lim)

    ks = jax.random.split(k_w, 5)
    params = (
        glorot(ks[0], input_dim, hidden_dim1), jnp.zeros((1, hidden_dim1), jnp.float32),
        glorot(ks[1], hidden_dim1, hidden_dim2), jnp.zeros((1, hidden_dim2), jnp.float32),
        glorot(ks[2], hidden_dim2, hidden_dim1), jnp.zeros((1, hidden_dim1), jnp.float32),
        glorot(ks[3], hidden_dim1, input_dim), jnp.zeros((1, input_dim), jnp.float32),
        glorot(ks[4], hidden_dim2, hidden_dim2), jnp.zeros((1, hidden_dim2), jnp.float32),
    )

    x_hat, a_hat = jax.block_until_ready(
        graph_autoencoder(a_norm, x, params, hidden_dim1=hidden_dim1))
    assert x_hat.shape == (N, input_dim) and x_hat.dtype == jnp.float32
    assert a_hat.shape == (N, N) and a_hat.dtype == jnp.float32

    # Tight check vs. a plain-JAX reference using the same bf16/f32 precision recipe.
    xm, am = _reference_mixed(a_norm, x, params, hidden_dim1)
    assert jnp.allclose(x_hat, xm, rtol=1e-3, atol=1e-3)
    assert jnp.allclose(a_hat, am, rtol=1e-3, atol=1e-3)

    # Loose check vs. the full-f32 reference (bf16 quantization tolerance).
    xf, af = _reference_f32(a_norm, x, params)
    assert jnp.allclose(x_hat, xf, rtol=3e-2, atol=3e-2)
    assert jnp.allclose(a_hat, af, rtol=3e-2, atol=3e-2)

    print("KERNEL_OK")
</pallas_src>

<mosaic_0001>
module attributes {stable_mosaic.version = 11 : i64} {
  func.func @gae_kernel(%arg0: memref<256x256xbf16, #tpu.memory_space<vmem>>, %arg1: memref<256x64xbf16, #tpu.memory_space<vmem>>, %arg2: memref<64x128xbf16, #tpu.memory_space<vmem>>, %arg3: memref<1x128xf32, #tpu.memory_space<vmem>>, %arg4: memref<128x64xbf16, #tpu.memory_space<vmem>>, %arg5: memref<1x64xf32, #tpu.memory_space<vmem>>, %arg6: memref<64x192xbf16, #tpu.memory_space<vmem>>, %arg7: memref<1x192xf32, #tpu.memory_space<vmem>>, %arg8: memref<128x64xbf16, #tpu.memory_space<vmem>>, %arg9: memref<1x64xf32, #tpu.memory_space<vmem>>, %arg10: memref<256x64xf32, #tpu.memory_space<vmem>>, %arg11: memref<256x256xf32, #tpu.memory_space<vmem>>) attributes {dimension_semantics = [], scalar_prefetch = 0 : i64, scratch_operands = 0 : i64, tpu.core_type = #tpu.core_type<tc>} {
    %c0 = arith.constant 0 : index
    %c0_0 = arith.constant 0 : index
    %0 = vector.load %arg0[%c0, %c0_0] : memref<256x256xbf16, #tpu.memory_space<vmem>>, vector<256x256xbf16>
    %c0_1 = arith.constant 0 : index
    %c0_2 = arith.constant 0 : index
    %1 = vector.load %arg1[%c0_1, %c0_2] : memref<256x64xbf16, #tpu.memory_space<vmem>>, vector<256x64xbf16>
    %cst = arith.constant dense<0.000000e+00> : vector<256x64xf32>
    %2 = tpu.matmul %0, %1, %cst {dimension_numbers = #tpu.dot_dimension_numbers<[1], [0], [0], [1], [0, 0, 1, 1], [], []>} : vector<256x256xbf16>, vector<256x64xbf16>, vector<256x64xf32> -> vector<256x64xf32>
    %3 = arith.truncf %2 : vector<256x64xf32> to vector<256x64xbf16>
    %c0_3 = arith.constant 0 : index
    %c0_4 = arith.constant 0 : index
    %4 = vector.load %arg2[%c0_3, %c0_4] : memref<64x128xbf16, #tpu.memory_space<vmem>>, vector<64x128xbf16>
    %cst_5 = arith.constant dense<0.000000e+00> : vector<256x128xf32>
    %5 = tpu.matmul %3, %4, %cst_5 {dimension_numbers = #tpu.dot_dimension_numbers<[1], [0], [0], [1], [0, 0, 1, 1], [], []>} : vector<256x64xbf16>, vector<64x128xbf16>, vector<256x128xf32> -> vector<256x128xf32>
    %c0_6 = arith.constant 0 : index
    %c0_7 = arith.constant 0 : index
    %6 = vector.load %arg3[%c0_6, %c0_7] : memref<1x128xf32, #tpu.memory_space<vmem>>, vector<1x128xf32>
    %7 = vector.broadcast %6 : vector<1x128xf32> to vector<256x128xf32>
    %8 = arith.addf %5, %7 : vector<256x128xf32>
    %cst_8 = arith.constant 0.000000e+00 : f32
    %9 = vector.broadcast %cst_8 : f32 to vector<256x128xf32>
    %10 = arith.maximumf %8, %9 : vector<256x128xf32>
    %11 = arith.truncf %10 : vector<256x128xf32> to vector<256x128xbf16>
    %c0_9 = arith.constant 0 : index
    %c0_10 = arith.constant 0 : index
    %12 = vector.load %arg4[%c0_9, %c0_10] : memref<128x64xbf16, #tpu.memory_space<vmem>>, vector<128x64xbf16>
    %cst_11 = arith.constant dense<0.000000e+00> : vector<256x64xf32>
    %13 = tpu.matmul %11, %12, %cst_11 {dimension_numbers = #tpu.dot_dimension_numbers<[1], [0], [0], [1], [0, 0, 1, 1], [], []>} : vector<256x128xbf16>, vector<128x64xbf16>, vector<256x64xf32> -> vector<256x64xf32>
    %14 = arith.truncf %13 : vector<256x64xf32> to vector<256x64xbf16>
    %cst_12 = arith.constant dense<0.000000e+00> : vector<256x64xf32>
    %15 = tpu.matmul %0, %14, %cst_12 {dimension_numbers = #tpu.dot_dimension_numbers<[1], [0], [0], [1], [0, 0, 1, 1], [], []>} : vector<256x256xbf16>, vector<256x64xbf16>, vector<256x64xf32> -> vector<256x64xf32>
    %c0_13 = arith.constant 0 : index
    %c0_14 = arith.constant 0 : index
    %16 = vector.load %arg5[%c0_13, %c0_14] : memref<1x64xf32, #tpu.memory_space<vmem>>, vector<1x64xf32>
    %17 = vector.broadcast %16 : vector<1x64xf32> to vector<256x64xf32>
    %18 = arith.addf %15, %17 : vector<256x64xf32>
    %cst_15 = arith.constant 0.000000e+00 : f32
    %19 = vector.broadcast %cst_15 : f32 to vector<256x64xf32>
    %20 = arith.maximumf %18, %19 : vector<256x64xf32>
    %21 = arith.truncf %20 : vector<256x64xf32> to vector<256x64xbf16>
    %cst_16 = arith.constant dense<0.000000e+00> : vector<256x64xf32>
    %22 = tpu.matmul %0, %21, %cst_16 {dimension_numbers = #tpu.dot_dimension_numbers<[1], [0], [0], [1], [0, 0, 1, 1], [], []>} : vector<256x256xbf16>, vector<256x64xbf16>, vector<256x64xf32> -> vector<256x64xf32>
    %23 = arith.truncf %22 : vector<256x64xf32> to vector<256x64xbf16>
    %c0_17 = arith.constant 0 : index
    %c0_18 = arith.constant 0 : index
    %24 = vector.load %arg6[%c0_17, %c0_18] : memref<64x192xbf16, #tpu.memory_space<vmem>>, vector<64x192xbf16>
    %cst_19 = arith.constant dense<0.000000e+00> : vector<256x192xf32>
    %25 = tpu.matmul %23, %24, %cst_19 {dimension_numbers = #tpu.dot_dimension_numbers<[1], [0], [0], [1], [0, 0, 1, 1], [], []>} : vector<256x64xbf16>, vector<64x192xbf16>, vector<256x192xf32> -> vector<256x192xf32>
    %c0_20 = arith.constant 0 : index
    %c0_21 = arith.constant 0 : index
    %26 = vector.load %arg7[%c0_20, %c0_21] : memref<1x192xf32, #tpu.memory_space<vmem>>, vector<1x192xf32>
    %27 = vector.broadcast %26 : vector<1x192xf32> to vector<256x192xf32>
    %28 = arith.addf %25, %27 : vector<256x192xf32>
    %29 = vector.extract_strided_slice %28 {offsets = [0, 0], sizes = [256, 128], strides = [1, 1]} : vector<256x192xf32> to vector<256x128xf32>
    %cst_22 = arith.constant 0.000000e+00 : f32
    %30 = vector.broadcast %cst_22 : f32 to vector<256x128xf32>
    %31 = arith.maximumf %29, %30 : vector<256x128xf32>
    %32 = arith.truncf %31 : vector<256x128xf32> to vector<256x128xbf16>
    %33 = vector.extract_strided_slice %28 {offsets = [0, 128], sizes = [256, 64], strides = [1, 1]} : vector<256x192xf32> to vector<256x64xf32>
    %cst_23 = arith.constant 0.000000e+00 : f32
    %34 = vector.broadcast %cst_23 : f32 to vector<256x64xf32>
    %35 = arith.maximumf %33, %34 : vector<256x64xf32>
    %36 = arith.truncf %35 : vector<256x64xf32> to vector<256x64xbf16>
    %c0_24 = arith.constant 0 : index
    %c0_25 = arith.constant 0 : index
    %37 = vector.load %arg8[%c0_24, %c0_25] : memref<128x64xbf16, #tpu.memory_space<vmem>>, vector<128x64xbf16>
    %cst_26 = arith.constant dense<0.000000e+00> : vector<256x64xf32>
    %38 = tpu.matmul %32, %37, %cst_26 {dimension_numbers = #tpu.dot_dimension_numbers<[1], [0], [0], [1], [0, 0, 1, 1], [], []>} : vector<256x128xbf16>, vector<128x64xbf16>, vector<256x64xf32> -> vector<256x64xf32>
    %39 = arith.truncf %38 : vector<256x64xf32> to vector<256x64xbf16>
    %cst_27 = arith.constant dense<0.000000e+00> : vector<256x64xf32>
    %40 = tpu.matmul %0, %39, %cst_27 {dimension_numbers = #tpu.dot_dimension_numbers<[1], [0], [0], [1], [0, 0, 1, 1], [], []>} : vector<256x256xbf16>, vector<256x64xbf16>, vector<256x64xf32> -> vector<256x64xf32>
    %c0_28 = arith.constant 0 : index
    %c0_29 = arith.constant 0 : index
    %41 = vector.load %arg9[%c0_28, %c0_29] : memref<1x64xf32, #tpu.memory_space<vmem>>, vector<1x64xf32>
    %42 = vector.broadcast %41 : vector<1x64xf32> to vector<256x64xf32>
    %43 = arith.addf %40, %42 : vector<256x64xf32>
    %c0_30 = arith.constant 0 : index
    %c0_31 = arith.constant 0 : index
    %44 = vector.load %arg10[%c0_30, %c0_31] : memref<256x64xf32, #tpu.memory_space<vmem>>, vector<256x64xf32>
    tpu.vector_store %arg10[%c0_30, %c0_31], %43 {strides = array<i32>} : memref<256x64xf32, #tpu.memory_space<vmem>>, vector<256x64xf32>,
    %cst_32 = arith.constant dense<0.000000e+00> : vector<256x256xf32>
    %45 = tpu.matmul %36, %36, %cst_32 {dimension_numbers = #tpu.dot_dimension_numbers<[1], [1], [0], [0], [0, 0, 1, 0], [], []>} : vector<256x64xbf16>, vector<256x64xbf16>, vector<256x256xf32> -> vector<256x256xf32>
    %c0_33 = arith.constant 0 : index
    %c0_34 = arith.constant 0 : index
    %46 = vector.load %arg11[%c0_33, %c0_34] : memref<256x256xf32, #tpu.memory_space<vmem>>, vector<256x256xf32>
    tpu.vector_store %arg11[%c0_33, %c0_34], %45 {strides = array<i32>} : memref<256x256xf32, #tpu.memory_space<vmem>>, vector<256x256xf32>,
    return
  }
}

</mosaic_0001>

<llo_original>
// kernel: tpu_custom_call.1
$region0: #{tpu_custom_call.1}
  #allocation0 [shape = 'u32[]', space=smem, size = 0x4, offset = 0x4, fixed_abs, tag = 'smem constant byte address 0x4 - core index']
  #allocation1 [shape = 'u32[144,128]{1,0:T(1,128)}', space=vmem, size = 0x12000, scoped, tag = 'internal scratch']
  %s0 = inlined_call_operand.vmem [shape: bf16[256,256], index: 0, kind: input, shape index: {}]
  %s1 = inlined_call_operand.vmem [shape: bf16[256,64], index: 1, kind: input, shape index: {}]
  %s2 = inlined_call_operand.vmem [shape: bf16[64,128], index: 2, kind: input, shape index: {}]
  %s3 = inlined_call_operand.vmem [shape: f32[1,128], index: 3, kind: input, shape index: {}]
  %s4 = inlined_call_operand.vmem [shape: bf16[128,64], index: 4, kind: input, shape index: {}]
  %s5 = inlined_call_operand.vmem [shape: f32[1,64], index: 5, kind: input, shape index: {}]
  %s6 = inlined_call_operand.vmem [shape: bf16[64,192], index: 6, kind: input, shape index: {}]
  %s7 = inlined_call_operand.vmem [shape: f32[1,192], index: 7, kind: input, shape index: {}]
  %s8 = inlined_call_operand.vmem [shape: bf16[128,64], index: 8, kind: input, shape index: {}]
  %s9 = inlined_call_operand.vmem [shape: f32[1,64], index: 9, kind: input, shape index: {}]
  %s10 = inlined_call_operand.vmem [shape: f32[256,64], index: 10, kind: output, shape index: {0}]
  %s11 = inlined_call_operand.hbm [shape: f32[256,256], index: 11, kind: output, shape index: {1}]
  %12 = xla_tuple %s10, %s11
  %s13 = sld [smem:[#allocation0]]
  $region58: #{tpu_custom_call.1} parent=0
    _
  %s15 = ssub.s32 1, %s13
  %s16 = scalar_select 0, %s15, %s13
  $region1: #{tpu_custom_call.1} parent=0
    #allocation2 [shape = 'u8[262144]{0}', space=vmem, size = 0x40000, scoped, tag = 'output window, operand 1, single buffered']
    #allocation3 [shape = 's32[1]{0}', space=sflag, size = 0x4, scoped, tag = 'scoped memory for tpu_custom_call.1']
    %17 = vsyncpa [#allocation3], 0
    // Predicated region
    $region2: #{tpu_custom_call.1} parent=1 // pred_check
      _
    $region3: #{tpu_custom_call.1} parent=1 // pred_check_branch
      %19 = sbr.rel (0) target = $region5
    $region4: #{tpu_custom_call.1} parent=1 // pred_region
      _
    $region5: #{tpu_custom_call.1} parent=1 // pred_fallthru
      _
    // Predicated region
    $region6: #{tpu_custom_call.1} parent=1 // pred_check
      _
    $region7: #{tpu_custom_call.1} parent=1 // pred_check_branch
      %21 = sbr.rel (0) target = $region9
    $region8: #{tpu_custom_call.1} parent=1 // pred_region
      _
    $region9: #{tpu_custom_call.1} parent=1 // pred_fallthru
      _
    // Predicated region
    $region10: #{tpu_custom_call.1} parent=1 // pred_check
      _
    $region11: #{tpu_custom_call.1} parent=1 // pred_check_branch
      %23 = sbr.rel (0) target = $region13
    $region12: #{tpu_custom_call.1} parent=1 // pred_region
      _
    $region13: #{tpu_custom_call.1} parent=1 // pred_fallthru
      _
    // Predicated region
    $region14: #{tpu_custom_call.1} parent=1 // pred_check
      _
    $region15: #{tpu_custom_call.1} parent=1 // pred_check_branch
      %25 = sbr.rel (0) target = $region17
    $region16: #{tpu_custom_call.1} parent=1 // pred_region
      _
    $region17: #{tpu_custom_call.1} parent=1 // pred_fallthru
      _
    // Predicated region
    $region18: #{tpu_custom_call.1} parent=1 // pred_check
      _
    $region19: #{tpu_custom_call.1} parent=1 // pred_check_branch
      %27 = sbr.rel (0) target = $region21
    $region20: #{tpu_custom_call.1} parent=1 // pred_region
      _
    $region21: #{tpu_custom_call.1} parent=1 // pred_fallthru
      _
    // Predicated region
    $region22: #{tpu_custom_call.1} parent=1 // pred_check
      _
    $region23: #{tpu_custom_call.1} parent=1 // pred_check_branch
      %29 = sbr.rel (0) target = $region25
    $region24: #{tpu_custom_call.1} parent=1 // pred_region
      _
    $region25: #{tpu_custom_call.1} parent=1 // pred_fallthru
      _
    // Predicated region
    $region26: #{tpu_custom_call.1} parent=1 // pred_check
      _
    $region27: #{tpu_custom_call.1} parent=1 // pred_check_branch
      %31 = sbr.rel (0) target = $region29
    $region28: #{tpu_custom_call.1} parent=1 // pred_region
      _
    $region29: #{tpu_custom_call.1} parent=1 // pred_fallthru
      _
    // Predicated region
    $region30: #{tpu_custom_call.1} parent=1 // pred_check
      _
    $region31: #{tpu_custom_call.1} parent=1 // pred_check_branch
      %33 = sbr.rel (0) target = $region33
    $region32: #{tpu_custom_call.1} parent=1 // pred_region
      _
    $region33: #{tpu_custom_call.1} parent=1 // pred_fallthru
      _
    // Predicated region
    $region34: #{tpu_custom_call.1} parent=1 // pred_check
      _
    $region35: #{tpu_custom_call.1} parent=1 // pred_check_branch
      %35 = sbr.rel (0) target = $region37
    $region36: #{tpu_custom_call.1} parent=1 // pred_region
      _
    $region37: #{tpu_custom_call.1} parent=1 // pred_fallthru
      _
    // Predicated region
    $region38: #{tpu_custom_call.1} parent=1 // pred_check
      _
    $region39: #{tpu_custom_call.1} parent=1 // pred_check_branch
      %37 = sbr.rel (0) target = $region41
    $region40: #{tpu_custom_call.1} parent=1 // pred_region
      _
    $region41: #{tpu_custom_call.1} parent=1 // pred_fallthru
      _
    %v39 = vld [vmem:[%s0] sm:$0xff]
    %v40 = vld [vmem:[%s0 + $0x8] sm:$0xff]
    %v41 = vld [vmem:[%s0 + $0x10] sm:$0xff]
    %v42 = vld [vmem:[%s0 + $0x18] sm:$0xff]
    %v43 = vld [vmem:[%s0 + $0x20] sm:$0xff]
    %v44 = vld [vmem:[%s0 + $0x28] sm:$0xff]
    %v45 = vld [vmem:[%s0 + $0x30] sm:$0xff]
    %v46 = vld [vmem:[%s0 + $0x38] sm:$0xff]
    %v47 = vld [vmem:[%s0 + $0x40] sm:$0xff]
    %v48 = vld [vmem:[%s0 + $0x48] sm:$0xff]
    %v49 = vld [vmem:[%s0 + $0x50] sm:$0xff]
    %v50 = vld [vmem:[%s0 + $0x58] sm:$0xff]
    %v51 = vld [vmem:[%s0 + $0x60] sm:$0xff]
    %v52 = vld [vmem:[%s0 + $0x68] sm:$0xff]
    %v53 = vld [vmem:[%s0 + $0x70] sm:$0xff]
    %v54 = vld [vmem:[%s0 + $0x78] sm:$0xff]
    %v55 = vld [vmem:[%s0 + $0x80] sm:$0xff]
    %v56 = vld [vmem:[%s0 + $0x88] sm:$0xff]
    %v57 = vld [vmem:[%s0 + $0x90] sm:$0xff]
    %v58 = vld [vmem:[%s0 + $0x98] sm:$0xff]
    %v59 = vld [vmem:[%s0 + $0xa0] sm:$0xff]
    %v60 = vld [vmem:[%s0 + $0xa8] sm:$0xff]
    %v61 = vld [vmem:[%s0 + $0xb0] sm:$0xff]
    %v62 = vld [vmem:[%s0 + $0xb8] sm:$0xff]
    %v63 = vld [vmem:[%s0 + $0xc0] sm:$0xff]
    %v64 = vld [vmem:[%s0 + $0xc8] sm:$0xff]
    %v65 = vld [vmem:[%s0 + $0xd0] sm:$0xff]
    %v66 = vld [vmem:[%s0 + $0xd8] sm:$0xff]
    %v67 = vld [vmem:[%s0 + $0xe0] sm:$0xff]
    %v68 = vld [vmem:[%s0 + $0xe8] sm:$0xff]
    %v69 = vld [vmem:[%s0 + $0xf0] sm:$0xff]
    %v70 = vld [vmem:[%s0 + $0xf8] sm:$0xff]
    %v71 = vld [vmem:[%s1] sm:$0xf]
    %v72 = vld [vmem:[%s1 + $0x4] sm:$0xf]
    %v73 = vld [vmem:[%s1 + $0x8] sm:$0xf]
    %v74 = vld [vmem:[%s1 + $0xc] sm:$0xf]
    %v75 = vld [vmem:[%s1 + $0x10] sm:$0xf]
    %v76 = vld [vmem:[%s1 + $0x14] sm:$0xf]
    %v77 = vld [vmem:[%s1 + $0x18] sm:$0xf]
    %v78 = vld [vmem:[%s1 + $0x1c] sm:$0xf]
    %v79 = vld [vmem:[%s1 + $0x20] sm:$0xf]
    %v80 = vld [vmem:[%s1 + $0x24] sm:$0xf]
    %v81 = vld [vmem:[%s1 + $0x28] sm:$0xf]
    %v82 = vld [vmem:[%s1 + $0x2c] sm:$0xf]
    %v83 = vld [vmem:[%s1 + $0x30] sm:$0xf]
    %v84 = vld [vmem:[%s1 + $0x34] sm:$0xf]
    %v85 = vld [vmem:[%s1 + $0x38] sm:$0xf]
    %v86 = vld [vmem:[%s1 + $0x3c] sm:$0xf]
    %v87 = vld [vmem:[%s1 + $0x40] sm:$0xf]
    %v88 = vld [vmem:[%s1 + $0x44] sm:$0xf]
    %v89 = vld [vmem:[%s1 + $0x48] sm:$0xf]
    %v90 = vld [vmem:[%s1 + $0x4c] sm:$0xf]
    %v91 = vld [vmem:[%s1 + $0x50] sm:$0xf]
    %v92 = vld [vmem:[%s1 + $0x54] sm:$0xf]
    %v93 = vld [vmem:[%s1 + $0x58] sm:$0xf]
    %v94 = vld [vmem:[%s1 + $0x5c] sm:$0xf]
    %v95 = vld [vmem:[%s1 + $0x60] sm:$0xf]
    %v96 = vld [vmem:[%s1 + $0x64] sm:$0xf]
    %v97 = vld [vmem:[%s1 + $0x68] sm:$0xf]
    %v98 = vld [vmem:[%s1 + $0x6c] sm:$0xf]
    %v99 = vld [vmem:[%s1 + $0x70] sm:$0xf]
    %v100 = vld [vmem:[%s1 + $0x74] sm:$0xf]
    %v101 = vld [vmem:[%s1 + $0x78] sm:$0xf]
    %v102 = vld [vmem:[%s1 + $0x7c] sm:$0xf]
    %v135 = vunpack.c.l.b16 %v39
    %v136 = vunpack.c.h.b16 %v39
    %v137 = vunpack.c.l.b16 %v40
    %v138 = vunpack.c.h.b16 %v40
    %v139 = vunpack.c.l.b16 %v41
    %v140 = vunpack.c.h.b16 %v41
    %v141 = vunpack.c.l.b16 %v42
    %v142 = vunpack.c.h.b16 %v42
    %v143 = vunpack.c.l.b16 %v43
    %v144 = vunpack.c.h.b16 %v43
    %v145 = vunpack.c.l.b16 %v44
    %v146 = vunpack.c.h.b16 %v44
    %v147 = vunpack.c.l.b16 %v45
    %v148 = vunpack.c.h.b16 %v45
    %v149 = vunpack.c.l.b16 %v46
    %v150 = vunpack.c.h.b16 %v46
    %v151 = vunpack.c.l.b16 %v47
    %v152 = vunpack.c.h.b16 %v47
    %v153 = vunpack.c.l.b16 %v48
    %v154 = vunpack.c.h.b16 %v48
    %v155 = vunpack.c.l.b16 %v49
    %v156 = vunpack.c.h.b16 %v49
    %v157 = vunpack.c.l.b16 %v50
    %v158 = vunpack.c.h.b16 %v50
    %v159 = vunpack.c.l.b16 %v51
    %v160 = vunpack.c.h.b16 %v51
    %v161 = vunpack.c.l.b16 %v52
    %v162 = vunpack.c.h.b16 %v52
    %v163 = vunpack.c.l.b16 %v53
    %v164 = vunpack.c.h.b16 %v53
    %v165 = vunpack.c.l.b16 %v54
    %v166 = vunpack.c.h.b16 %v54
    %v167 = vunpack.c.l.b16 %v55
    %v168 = vunpack.c.h.b16 %v55
    %v169 = vunpack.c.l.b16 %v56
    %v170 = vunpack.c.h.b16 %v56
    %v171 = vunpack.c.l.b16 %v57
    %v172 = vunpack.c.h.b16 %v57
    %v173 = vunpack.c.l.b16 %v58
    %v174 = vunpack.c.h.b16 %v58
    %v175 = vunpack.c.l.b16 %v59
    %v176 = vunpack.c.h.b16 %v59
    %v177 = vunpack.c.l.b16 %v60
    %v178 = vunpack.c.h.b16 %v60
    %v179 = vunpack.c.l.b16 %v61
    %v180 = vunpack.c.h.b16 %v61
    %v181 = vunpack.c.l.b16 %v62
    %v182 = vunpack.c.h.b16 %v62
    %v183 = vunpack.c.l.b16 %v63
    %v184 = vunpack.c.h.b16 %v63
    %v185 = vunpack.c.l.b16 %v64
    %v186 = vunpack.c.h.b16 %v64
    %v187 = vunpack.c.l.b16 %v65
    %v188 = vunpack.c.h.b16 %v65
    %v189 = vunpack.c.l.b16 %v66
    %v190 = vunpack.c.h.b16 %v66
    %v191 = vunpack.c.l.b16 %v67
    %v192 = vunpack.c.h.b16 %v67
    %v193 = vunpack.c.l.b16 %v68
    %v194 = vunpack.c.h.b16 %v68
    %v195 = vunpack.c.l.b16 %v69
    %v196 = vunpack.c.h.b16 %v69
    %v197 = vunpack.c.l.b16 %v70
    %v198 = vunpack.c.h.b16 %v70
    %v199 = vpack.c.b16 %v137, %v135
    %v200 = vpack.c.b16 %v138, %v136
    %v201 = vpack.c.b16 %v141, %v139
    %v202 = vpack.c.b16 %v142, %v140
    %v203 = vpack.c.b16 %v145, %v143
    %v204 = vpack.c.b16 %v146, %v144
    %v205 = vpack.c.b16 %v149, %v147
    %v206 = vpack.c.b16 %v150, %v148
    %v207 = vpack.c.b16 %v153, %v151
    %v208 = vpack.c.b16 %v154, %v152
    %v209 = vpack.c.b16 %v157, %v155
    %v210 = vpack.c.b16 %v158, %v156
    %v211 = vpack.c.b16 %v161, %v159
    %v212 = vpack.c.b16 %v162, %v160
    %v213 = vpack.c.b16 %v165, %v163
    %v214 = vpack.c.b16 %v166, %v164
    %v215 = vpack.c.b16 %v169, %v167
    %v216 = vpack.c.b16 %v170, %v168
    %v217 = vpack.c.b16 %v173, %v171
    %v218 = vpack.c.b16 %v174, %v172
    %v219 = vpack.c.b16 %v177, %v175
    %v220 = vpack.c.b16 %v178, %v176
    %v221 = vpack.c.b16 %v181, %v179
    %v222 = vpack.c.b16 %v182, %v180
    %v223 = vpack.c.b16 %v185, %v183
    %v224 = vpack.c.b16 %v186, %v184
    %v225 = vpack.c.b16 %v189, %v187
    %v226 = vpack.c.b16 %v190, %v188
    %v227 = vpack.c.b16 %v193, %v191
    %v228 = vpack.c.b16 %v194, %v192
    %v229 = vpack.c.b16 %v197, %v195
    %v230 = vpack.c.b16 %v198, %v196
    %v295 = vunpack.c.l.b16 %v71
    %v296 = vunpack.c.l.b16 %v72
    %v297 = vunpack.c.l.b16 %v73
    %v298 = vunpack.c.l.b16 %v74
    %v299 = vunpack.c.l.b16 %v75
    %v300 = vunpack.c.l.b16 %v76
    %v301 = vunpack.c.l.b16 %v77
    %v302 = vunpack.c.l.b16 %v78
    %v303 = vunpack.c.l.b16 %v79
    %v304 = vunpack.c.l.b16 %v80
    %v305 = vunpack.c.l.b16 %v81
    %v306 = vunpack.c.l.b16 %v82
    %v307 = vunpack.c.l.b16 %v83
    %v308 = vunpack.c.l.b16 %v84
    %v309 = vunpack.c.l.b16 %v85
    %v310 = vunpack.c.l.b16 %v86
    %v311 = vunpack.c.l.b16 %v87
    %v312 = vunpack.c.l.b16 %v88
    %v313 = vunpack.c.l.b16 %v89
    %v314 = vunpack.c.l.b16 %v90
    %v315 = vunpack.c.l.b16 %v91
    %v316 = vunpack.c.l.b16 %v92
    %v317 = vunpack.c.l.b16 %v93
    %v318 = vunpack.c.l.b16 %v94
    %v319 = vunpack.c.l.b16 %v95
    %v320 = vunpack.c.l.b16 %v96
    %v321 = vunpack.c.l.b16 %v97
    %v322 = vunpack.c.l.b16 %v98
    %v323 = vunpack.c.l.b16 %v99
    %v324 = vunpack.c.l.b16 %v100
    %v325 = vunpack.c.l.b16 %v101
    %v326 = vunpack.c.l.b16 %v102
    %v327 = vpack.c.b16 %v296, %v295
    %v328 = vpack.c.b16 %v298, %v297
    %v329 = vpack.c.b16 %v300, %v299
    %v330 = vpack.c.b16 %v302, %v301
    %v331 = vpack.c.b16 %v304, %v303
    %v332 = vpack.c.b16 %v306, %v305
    %v333 = vpack.c.b16 %v308, %v307
    %v334 = vpack.c.b16 %v310, %v309
    %v335 = vpack.c.b16 %v312, %v311
    %v336 = vpack.c.b16 %v314, %v313
    %v337 = vpack.c.b16 %v316, %v315
    %v338 = vpack.c.b16 %v318, %v317
    %v339 = vpack.c.b16 %v320, %v319
    %v340 = vpack.c.b16 %v322, %v321
    %v341 = vpack.c.b16 %v324, %v323
    %v342 = vpack.c.b16 %v326, %v325
    %359 = vmatprep.subr.bf16.mxu0 0
    %360 = vmatpush1.bf16.msra.mxu0 %v334
    %361 = vmatprep.subr.bf16.mxu0 0
    %362 = vmatpush1.bf16.msra.mxu0 %v333
    %363 = vmatprep.subr.bf16.mxu0 0
    %364 = vmatpush1.bf16.msra.mxu0 %v332
    %365 = vmatprep.subr.bf16.mxu0 0
    %366 = vmatpush1.bf16.msra.mxu0 %v331
    %367 = vmatprep.subr.bf16.mxu0 0
    %368 = vmatpush1.bf16.msra.mxu0 %v330
    %369 = vmatprep.subr.bf16.mxu0 0
    %370 = vmatpush1.bf16.msra.mxu0 %v329
    %371 = vmatprep.subr.bf16.mxu0 0
    %372 = vmatpush1.bf16.msra.mxu0 %v328
    %373 = vmatprep.subr.bf16.mxu0 0
    %374 = vmatpush1.bf16.msra.mxu0 %v327
    %375 = vmatprep.subr.bf16.mxu0 0
    %376 = vmatpush2.bf16.msra.mxu0 %v342
    %377 = vmatprep.subr.bf16.mxu0 0
    %378 = vmatpush2.bf16.msra.mxu0 %v341
    %379 = vmatprep.subr.bf16.mxu0 0
    %380 = vmatpush2.bf16.msra.mxu0 %v340
    %381 = vmatprep.subr.bf16.mxu0 0
    %382 = vmatpush2.bf16.msra.mxu0 %v339
    %383 = vmatprep.subr.bf16.mxu0 0
    %384 = vmatpush2.bf16.msra.mxu0 %v338
    %385 = vmatprep.subr.bf16.mxu0 0
    %386 = vmatpush2.bf16.msra.mxu0 %v337
    %387 = vmatprep.subr.bf16.mxu0 0
    %388 = vmatpush2.bf16.msra.mxu0 %v336
    %389 = vmatprep.subr.bf16.mxu0 0
    %390 = vmatpush2.bf16.msra.mxu0 %v335
    %391 = vmatprep.mubr.bf16.mxu0 %v200
    %392 = vmatmul.mubr.bf16.gmra.mxu0 %v199
    %v393 = vpop.f32.mrf.mxu0
    %v394 = vadd.f32 0.0, %v393
    %v395 = vpop.f32.mrf.mxu0
    %v396 = vpop.f32.mrf.mxu0
    %v397 = vadd.f32 0.0, %v396
    %v398 = vpop.f32.mrf.mxu0
    %399 = vmatprep.mubr.bf16.mxu0 %v202
    %400 = vmatmul.mubr.bf16.gmra.mxu0 %v201
    %v401 = vpop.f32.mrf.mxu0
    %v402 = vadd.f32 0.0, %v401
    %v403 = vpop.f32.mrf.mxu0
    %v404 = vpop.f32.mrf.mxu0
    %v405 = vadd.f32 0.0, %v404
    %v406 = vpop.f32.mrf.mxu0
    %407 = vmatprep.mubr.bf16.mxu0 %v204
    %408 = vmatmul.mubr.bf16.gmra.mxu0 %v203
    %v409 = vpop.f32.mrf.mxu0
    %v410 = vadd.f32 0.0, %v409
    %v411 = vpop.f32.mrf.mxu0
    %v412 = vpop.f32.mrf.mxu0
    %v413 = vadd.f32 0.0, %v412
    %v414 = vpop.f32.mrf.mxu0
    %415 = vmatprep.mubr.bf16.mxu0 %v206
    %416 = vmatmul.mubr.bf16.gmra.mxu0 %v205
    %v417 = vpop.f32.mrf.mxu0
    %v418 = vadd.f32 0.0, %v417
    %v419 = vpop.f32.mrf.mxu0
    %v420 = vpop.f32.mrf.mxu0
    %v421 = vadd.f32 0.0, %v420
    %v422 = vpop.f32.mrf.mxu0
    %423 = vmatprep.mubr.bf16.mxu0 %v208
    %424 = vmatmul.mubr.bf16.gmra.mxu0 %v207
    %v425 = vpop.f32.mrf.mxu0
    %v426 = vadd.f32 0.0, %v425
    %v427 = vpop.f32.mrf.mxu0
    %v428 = vpop.f32.mrf.mxu0
    %v429 = vadd.f32 0.0, %v428
    %v430 = vpop.f32.mrf.mxu0
    %431 = vmatprep.mubr.bf16.mxu0 %v210
    %432 = vmatmul.mubr.bf16.gmra.mxu0 %v209
    %v433 = vpop.f32.mrf.mxu0
    %v434 = vadd.f32 0.0, %v433
    %v435 = vpop.f32.mrf.mxu0
    %v436 = vpop.f32.mrf.mxu0
    %v437 = vadd.f32 0.0, %v436
    %v438 = vpop.f32.mrf.mxu0
    %439 = vmatprep.mubr.bf16.mxu0 %v212
    %440 = vmatmul.mubr.bf16.gmra.mxu0 %v211
    %v441 = vpop.f32.mrf.mxu0
    %v442 = vadd.f32 0.0, %v441
    %v443 = vpop.f32.mrf.mxu0
    %v444 = vpop.f32.mrf.mxu0
    %v445 = vadd.f32 0.0, %v444
    %v446 = vpop.f32.mrf.mxu0
    %447 = vmatprep.mubr.bf16.mxu0 %v214
    %448 = vmatmul.mubr.bf16.gmra.mxu0 %v213
    %v449 = vpop.f32.mrf.mxu0
    %v450 = vadd.f32 0.0, %v449
    %v451 = vpop.f32.mrf.mxu0
    %v452 = vpop.f32.mrf.mxu0
    %v453 = vadd.f32 0.0, %v452
    %v454 = vpop.f32.mrf.mxu0
    %455 = vmatprep.mubr.bf16.mxu0 %v216
    %456 = vmatmul.mubr.bf16.gmra.mxu0 %v215
    %v457 = vpop.f32.mrf.mxu0
    %v458 = vadd.f32 0.0, %v457
    %v459 = vpop.f32.mrf.mxu0
    %v460 = vpop.f32.mrf.mxu0
    %v461 = vadd.f32 0.0, %v460
    %v462 = vpop.f32.mrf.mxu0
    %463 = vmatprep.mubr.bf16.mxu0 %v218
    %464 = vmatmul.mubr.bf16.gmra.mxu0 %v217
    %v465 = vpop.f32.mrf.mxu0
    %v466 = vadd.f32 0.0, %v465
    %v467 = vpop.f32.mrf.mxu0
    %v468 = vpop.f32.mrf.mxu0
    %v469 = vadd.f32 0.0, %v468
    %v470 = vpop.f32.mrf.mxu0
    %471 = vmatprep.mubr.bf16.mxu0 %v220
    %472 = vmatmul.mubr.bf16.gmra.mxu0 %v219
    %v473 = vpop.f32.mrf.mxu0
    %v474 = vadd.f32 0.0, %v473
    %v475 = vpop.f32.mrf.mxu0
    %v476 = vpop.f32.mrf.mxu0
    %v477 = vadd.f32 0.0, %v476
    %v478 = vpop.f32.mrf.mxu0
    %479 = vmatprep.mubr.bf16.mxu0 %v222
    %480 = vmatmul.mubr.bf16.gmra.mxu0 %v221
    %v481 = vpop.f32.mrf.mxu0
    %v482 = vadd.f32 0.0, %v481
    %v483 = vpop.f32.mrf.mxu0
    %v484 = vpop.f32.mrf.mxu0
    %v485 = vadd.f32 0.0, %v484
    %v486 = vpop.f32.mrf.mxu0
    %487 = vmatprep.mubr.bf16.mxu0 %v224
    %488 = vmatmul.mubr.bf16.gmra.mxu0 %v223
    %v489 = vpop.f32.mrf.mxu0
    %v490 = vadd.f32 0.0, %v489
    %v491 = vpop.f32.mrf.mxu0
    %v492 = vpop.f32.mrf.mxu0
    %v493 = vadd.f32 0.0, %v492
    %v494 = vpop.f32.mrf.mxu0
    %495 = vmatprep.mubr.bf16.mxu0 %v226
    %496 = vmatmul.mubr.bf16.gmra.mxu0 %v225
    %v497 = vpop.f32.mrf.mxu0
    %v498 = vadd.f32 0.0, %v497
    %v499 = vpop.f32.mrf.mxu0
    %v500 = vpop.f32.mrf.mxu0
    %v501 = vadd.f32 0.0, %v500
    %v502 = vpop.f32.mrf.mxu0
    %503 = vmatprep.mubr.bf16.mxu0 %v228
    %504 = vmatmul.mubr.bf16.gmra.mxu0 %v227
    %v505 = vpop.f32.mrf.mxu0
    %v506 = vadd.f32 0.0, %v505
    %v507 = vpop.f32.mrf.mxu0
    %v508 = vpop.f32.mrf.mxu0
    %v509 = vadd.f32 0.0, %v508
    %v510 = vpop.f32.mrf.mxu0
    %511 = vmatprep.mubr.bf16.mxu0 %v230
    %512 = vmatmul.mubr.bf16.gmra.mxu0 %v229
    %v513 = vpop.f32.mrf.mxu0
    %v514 = vadd.f32 0.0, %v513
    %v515 = vpop.f32.mrf.mxu0
    %v516 = vpop.f32.mrf.mxu0
    %v517 = vadd.f32 0.0, %v516
    %v518 = vpop.f32.mrf.mxu0
    %519 = vdwg.mxu0
    %v520 = vpack.c.bf16 %v397, %v394
    %v521 = vpack.c.bf16 %v405, %v402
    %v522 = vpack.c.bf16 %v413, %v410
    %v523 = vpack.c.bf16 %v421, %v418
    %v524 = vpack.c.bf16 %v429, %v426
    %v525 = vpack.c.bf16 %v437, %v434
    %v526 = vpack.c.bf16 %v445, %v442
    %v527 = vpack.c.bf16 %v453, %v450
    %v528 = vpack.c.bf16 %v461, %v458
    %v529 = vpack.c.bf16 %v469, %v466
    %v530 = vpack.c.bf16 %v477, %v474
    %v531 = vpack.c.bf16 %v485, %v482
    %v532 = vpack.c.bf16 %v493, %v490
    %v533 = vpack.c.bf16 %v501, %v498
    %v534 = vpack.c.bf16 %v509, %v506
    %v535 = vpack.c.bf16 %v517, %v514
    %v536 = vld [vmem:[%s2] sm:$0xf]
    %v537 = vld [vmem:[%s2 + $0x4] sm:$0xf]
    %v538 = vld [vmem:[%s2 + $0x8] sm:$0xf]
    %v539 = vld [vmem:[%s2 + $0xc] sm:$0xf]
    %v540 = vld [vmem:[%s2 + $0x10] sm:$0xf]
    %v541 = vld [vmem:[%s2 + $0x14] sm:$0xf]
    %v542 = vld [vmem:[%s2 + $0x18] sm:$0xf]
    %v543 = vld [vmem:[%s2 + $0x1c] sm:$0xf]
    %v544 = vld [vmem:[%s3] sm:$0x1]
    %v546 = vlaneseq
    %v547 = vshrl.u32 %v546, 7
    %v548 = vsub.s32 0, %v547
    %v549 = vrot.slane %v544, %v548
    %v559 = vunpack.c.l.b16 %v536
    %v560 = vunpack.c.l.b16 %v537
    %v561 = vunpack.c.l.b16 %v538
    %v562 = vunpack.c.l.b16 %v539
    %v563 = vunpack.c.l.b16 %v540
    %v564 = vunpack.c.l.b16 %v541
    %v565 = vunpack.c.l.b16 %v542
    %v566 = vunpack.c.l.b16 %v543
    %v567 = vpack.c.b16 %v560, %v559
    %v568 = vpack.c.b16 %v562, %v561
    %v569 = vpack.c.b16 %v564, %v563
    %v570 = vpack.c.b16 %v566, %v565
    %vm575 = vcmask 523264
    %v577 = vsel %vm575, %v520, 0
    %v580 = vsel %vm575, %v521, 0
    %v583 = vsel %vm575, %v522, 0
    %v586 = vsel %vm575, %v523, 0
    %v589 = vsel %vm575, %v524, 0
    %v592 = vsel %vm575, %v525, 0
    %v595 = vsel %vm575, %v526, 0
    %v598 = vsel %vm575, %v527, 0
    %v601 = vsel %vm575, %v528, 0
    %v604 = vsel %vm575, %v529, 0
    %v607 = vsel %vm575, %v530, 0
    %v610 = vsel %vm575, %v531, 0
    %v613 = vsel %vm575, %v532, 0
    %v616 = vsel %vm575, %v533, 0
    %v619 = vsel %vm575, %v534, 0
    %v622 = vsel %vm575, %v535, 0
    %624 = vmatprep.subr.bf16.mxu0 0
    %625 = vmatpush1.bf16.msra.mxu0 0
    %626 = vmatprep.subr.bf16.mxu0 0
    %627 = vmatpush1.bf16.msra.mxu0 0
    %628 = vmatprep.subr.bf16.mxu0 0
    %629 = vmatpush1.bf16.msra.mxu0 0
    %630 = vmatprep.subr.bf16.mxu0 0
    %631 = vmatpush1.bf16.msra.mxu0 0
    %632 = vmatprep.subr.bf16.mxu0 0
    %633 = vmatpush1.bf16.msra.mxu0 %v570
    %634 = vmatprep.subr.bf16.mxu0 0
    %635 = vmatpush1.bf16.msra.mxu0 %v569
    %636 = vmatprep.subr.bf16.mxu0 0
    %637 = vmatpush1.bf16.msra.mxu0 %v568
    %638 = vmatprep.subr.bf16.mxu0 0
    %639 = vmatpush1.bf16.msra.mxu0 %v567
    %640 = vmatprep.subr.bf16.mxu0 0
    %641 = vmatpush2.bf16.msra.mxu0 0
    %642 = vmatprep.subr.bf16.mxu0 0
    %643 = vmatpush2.bf16.msra.mxu0 0
    %644 = vmatprep.subr.bf16.mxu0 0
    %645 = vmatpush2.bf16.msra.mxu0 0
    %646 = vmatprep.subr.bf16.mxu0 0
    %647 = vmatpush2.bf16.msra.mxu0 0
    %648 = vmatprep.subr.bf16.mxu0 0
    %649 = vmatpush2.bf16.msra.mxu0 0
    %650 = vmatprep.subr.bf16.mxu0 0
    %651 = vmatpush2.bf16.msra.mxu0 0
    %652 = vmatprep.subr.bf16.mxu0 0
    %653 = vmatpush2.bf16.msra.mxu0 0
    %654 = vmatprep.subr.bf16.mxu0 0
    %655 = vmatpush2.bf16.msra.mxu0 0
    %656 = vmatprep.mubr.bf16.mxu0 0
    %657 = vmatmul.mubr.bf16.gmra.mxu0 %v577
    %v658 = vpop.f32.mrf.mxu0
    %v659 = vadd.f32 %v549, %v658
    %v660 = vpop.f32.mrf.mxu0
    %v661 = vpop.f32.mrf.mxu0
    %v662 = vadd.f32 %v549, %v661
    %v663 = vpop.f32.mrf.mxu0
    %664 = vmatprep.mubr.bf16.mxu0 0
    %665 = vmatmul.mubr.bf16.gmra.mxu0 %v580
    %v666 = vpop.f32.mrf.mxu0
    %v667 = vadd.f32 %v549, %v666
    %v668 = vpop.f32.mrf.mxu0
    %v669 = vpop.f32.mrf.mxu0
    %v670 = vadd.f32 %v549, %v669
    %v671 = vpop.f32.mrf.mxu0
    %672 = vmatprep.mubr.bf16.mxu0 0
    %673 = vmatmul.mubr.bf16.gmra.mxu0 %v583
    %v674 = vpop.f32.mrf.mxu0
    %v675 = vadd.f32 %v549, %v674
    %v676 = vpop.f32.mrf.mxu0
    %v677 = vpop.f32.mrf.mxu0
    %v678 = vadd.f32 %v549, %v677
    %v679 = vpop.f32.mrf.mxu0
    %680 = vmatprep.mubr.bf16.mxu0 0
    %681 = vmatmul.mubr.bf16.gmra.mxu0 %v586
    %v682 = vpop.f32.mrf.mxu0
    %v683 = vadd.f32 %v549, %v682
    %v684 = vpop.f32.mrf.mxu0
    %v685 = vpop.f32.mrf.mxu0
    %v686 = vadd.f32 %v549, %v685
    %v687 = vpop.f32.mrf.mxu0
    %688 = vmatprep.mubr.bf16.mxu0 0
    %689 = vmatmul.mubr.bf16.gmra.mxu0 %v589
    %v690 = vpop.f32.mrf.mxu0
    %v691 = vadd.f32 %v549, %v690
    %v692 = vpop.f32.mrf.mxu0
    %v693 = vpop.f32.mrf.mxu0
    %v694 = vadd.f32 %v549, %v693
    %v695 = vpop.f32.mrf.mxu0
    %696 = vmatprep.mubr.bf16.mxu0 0
    %697 = vmatmul.mubr.bf16.gmra.mxu0 %v592
    %v698 = vpop.f32.mrf.mxu0
    %v699 = vadd.f32 %v549, %v698
    %v700 = vpop.f32.mrf.mxu0
    %v701 = vpop.f32.mrf.mxu0
    %v702 = vadd.f32 %v549, %v701
    %v703 = vpop.f32.mrf.mxu0
    %704 = vmatprep.mubr.bf16.mxu0 0
    %705 = vmatmul.mubr.bf16.gmra.mxu0 %v595
    %v706 = vpop.f32.mrf.mxu0
    %v707 = vadd.f32 %v549, %v706
    %v708 = vpop.f32.mrf.mxu0
    %v709 = vpop.f32.mrf.mxu0
    %v710 = vadd.f32 %v549, %v709
    %v711 = vpop.f32.mrf.mxu0
    %712 = vmatprep.mubr.bf16.mxu0 0
    %713 = vmatmul.mubr.bf16.gmra.mxu0 %v598
    %v714 = vpop.f32.mrf.mxu0
    %v715 = vadd.f32 %v549, %v714
    %v716 = vpop.f32.mrf.mxu0
    %v717 = vpop.f32.mrf.mxu0
    %v718 = vadd.f32 %v549, %v717
    %v719 = vpop.f32.mrf.mxu0
    %720 = vmatprep.mubr.bf16.mxu0 0
    %721 = vmatmul.mubr.bf16.gmra.mxu0 %v601
    %v722 = vpop.f32.mrf.mxu0
    %v723 = vadd.f32 %v549, %v722
    %v724 = vpop.f32.mrf.mxu0
    %v725 = vpop.f32.mrf.mxu0
    %v726 = vadd.f32 %v549, %v725
    %v727 = vpop.f32.mrf.mxu0
    %728 = vmatprep.mubr.bf16.mxu0 0
    %729 = vmatmul.mubr.bf16.gmra.mxu0 %v604
    %v730 = vpop.f32.mrf.mxu0
    %v731 = vadd.f32 %v549, %v730
    %v732 = vpop.f32.mrf.mxu0
    %v733 = vpop.f32.mrf.mxu0
    %v734 = vadd.f32 %v549, %v733
    %v735 = vpop.f32.mrf.mxu0
    %736 = vmatprep.mubr.bf16.mxu0 0
    %737 = vmatmul.mubr.bf16.gmra.mxu0 %v607
    %v738 = vpop.f32.mrf.mxu0
    %v739 = vadd.f32 %v549, %v738
    %v740 = vpop.f32.mrf.mxu0
    %v741 = vpop.f32.mrf.mxu0
    %v742 = vadd.f32 %v549, %v741
    %v743 = vpop.f32.mrf.mxu0
    %744 = vmatprep.mubr.bf16.mxu0 0
    %745 = vmatmul.mubr.bf16.gmra.mxu0 %v610
    %v746 = vpop.f32.mrf.mxu0
    %v747 = vadd.f32 %v549, %v746
    %v748 = vpop.f32.mrf.mxu0
    %v749 = vpop.f32.mrf.mxu0
    %v750 = vadd.f32 %v549, %v749
    %v751 = vpop.f32.mrf.mxu0
    %752 = vmatprep.mubr.bf16.mxu0 0
    %753 = vmatmul.mubr.bf16.gmra.mxu0 %v613
    %v754 = vpop.f32.mrf.mxu0
    %v755 = vadd.f32 %v549, %v754
    %v756 = vpop.f32.mrf.mxu0
    %v757 = vpop.f32.mrf.mxu0
    %v758 = vadd.f32 %v549, %v757
    %v759 = vpop.f32.mrf.mxu0
    %760 = vmatprep.mubr.bf16.mxu0 0
    %761 = vmatmul.mubr.bf16.gmra.mxu0 %v616
    %v762 = vpop.f32.mrf.mxu0
    %v763 = vadd.f32 %v549, %v762
    %v764 = vpop.f32.mrf.mxu0
    %v765 = vpop.f32.mrf.mxu0
    %v766 = vadd.f32 %v549, %v765
    %v767 = vpop.f32.mrf.mxu0
    %768 = vmatprep.mubr.bf16.mxu0 0
    %769 = vmatmul.mubr.bf16.gmra.mxu0 %v619
    %v770 = vpop.f32.mrf.mxu0
    %v771 = vadd.f32 %v549, %v770
    %v772 = vpop.f32.mrf.mxu0
    %v773 = vpop.f32.mrf.mxu0
    %v774 = vadd.f32 %v549, %v773
    %v775 = vpop.f32.mrf.mxu0
    %776 = vmatprep.mubr.bf16.mxu0 0
    %777 = vmatmul.mubr.bf16.gmra.mxu0 %v622
    %v778 = vpop.f32.mrf.mxu0
    %v779 = vadd.f32 %v549, %v778
    %v780 = vpop.f32.mrf.mxu0
    %v781 = vpop.f32.mrf.mxu0
    %v782 = vadd.f32 %v549, %v781
    %v783 = vpop.f32.mrf.mxu0
    %784 = vdwg.mxu0
    %v785 = vmax.f32 %v659, 0.0
    %v786 = vmax.f32 %v662, 0.0
    %v787 = vmax.f32 %v667, 0.0
    %v788 = vmax.f32 %v670, 0.0
    %v789 = vmax.f32 %v675, 0.0
    %v790 = vmax.f32 %v678, 0.0
    %v791 = vmax.f32 %v683, 0.0
    %v792 = vmax.f32 %v686, 0.0
    %v793 = vmax.f32 %v691, 0.0
    %v794 = vmax.f32 %v694, 0.0
    %v795 = vmax.f32 %v699, 0.0
    %v796 = vmax.f32 %v702, 0.0
    %v797 = vmax.f32 %v707, 0.0
    %v798 = vmax.f32 %v710, 0.0
    %v799 = vmax.f32 %v715, 0.0
    %v800 = vmax.f32 %v718, 0.0
    %v801 = vmax.f32 %v723, 0.0
    %v802 = vmax.f32 %v726, 0.0
    %v803 = vmax.f32 %v731, 0.0
    %v804 = vmax.f32 %v734, 0.0
    %v805 = vmax.f32 %v739, 0.0
    %v806 = vmax.f32 %v742, 0.0
    %v807 = vmax.f32 %v747, 0.0
    %v808 = vmax.f32 %v750, 0.0
    %v809 = vmax.f32 %v755, 0.0
    %v810 = vmax.f32 %v758, 0.0
    %v811 = vmax.f32 %v763, 0.0
    %v812 = vmax.f32 %v766, 0.0
    %v813 = vmax.f32 %v771, 0.0
    %v814 = vmax.f32 %v774, 0.0
    %v815 = vmax.f32 %v779, 0.0
    %v816 = vmax.f32 %v782, 0.0
    %v817 = vpack.c.bf16 %v786, %v785
    %v818 = vpack.c.bf16 %v788, %v787
    %v819 = vpack.c.bf16 %v790, %v789
    %v820 = vpack.c.bf16 %v792, %v791
    %v821 = vpack.c.bf16 %v794, %v793
    %v822 = vpack.c.bf16 %v796, %v795
    %v823 = vpack.c.bf16 %v798, %v797
    %v824 = vpack.c.bf16 %v800, %v799
    %v825 = vpack.c.bf16 %v802, %v801
    %v826 = vpack.c.bf16 %v804, %v803
    %v827 = vpack.c.bf16 %v806, %v805
    %v828 = vpack.c.bf16 %v808, %v807
    %v829 = vpack.c.bf16 %v810, %v809
    %v830 = vpack.c.bf16 %v812, %v811
    %v831 = vpack.c.bf16 %v814, %v813
    %v832 = vpack.c.bf16 %v816, %v815
    %v833 = vld [vmem:[%s4] sm:$0xf]
    %v834 = vld [vmem:[%s4 + $0x4] sm:$0xf]
    %v835 = vld [vmem:[%s4 + $0x8] sm:$0xf]
    %v836 = vld [vmem:[%s4 + $0xc] sm:$0xf]
    %v837 = vld [vmem:[%s4 + $0x10] sm:$0xf]
    %v838 = vld [vmem:[%s4 + $0x14] sm:$0xf]
    %v839 = vld [vmem:[%s4 + $0x18] sm:$0xf]
    %v840 = vld [vmem:[%s4 + $0x1c] sm:$0xf]
    %v841 = vld [vmem:[%s4 + $0x20] sm:$0xf]
    %v842 = vld [vmem:[%s4 + $0x24] sm:$0xf]
    %v843 = vld [vmem:[%s4 + $0x28] sm:$0xf]
    %v844 = vld [vmem:[%s4 + $0x2c] sm:$0xf]
    %v845 = vld [vmem:[%s4 + $0x30] sm:$0xf]
    %v846 = vld [vmem:[%s4 + $0x34] sm:$0xf]
    %v847 = vld [vmem:[%s4 + $0x38] sm:$0xf]
    %v848 = vld [vmem:[%s4 + $0x3c] sm:$0xf]
    %v865 = vunpack.c.l.b16 %v833
    %v866 = vunpack.c.l.b16 %v834
    %v867 = vunpack.c.l.b16 %v835
    %v868 = vunpack.c.l.b16 %v836
    %v869 = vunpack.c.l.b16 %v837
    %v870 = vunpack.c.l.b16 %v838
    %v871 = vunpack.c.l.b16 %v839
    %v872 = vunpack.c.l.b16 %v840
    %v873 = vunpack.c.l.b16 %v841
    %v874 = vunpack.c.l.b16 %v842
    %v875 = vunpack.c.l.b16 %v843
    %v876 = vunpack.c.l.b16 %v844
    %v877 = vunpack.c.l.b16 %v845
    %v878 = vunpack.c.l.b16 %v846
    %v879 = vunpack.c.l.b16 %v847
    %v880 = vunpack.c.l.b16 %v848
    %v881 = vpack.c.b16 %v866, %v865
    %v882 = vpack.c.b16 %v868, %v867
    %v883 = vpack.c.b16 %v870, %v869
    %v884 = vpack.c.b16 %v872, %v871
    %v885 = vpack.c.b16 %v874, %v873
    %v886 = vpack.c.b16 %v876, %v875
    %v887 = vpack.c.b16 %v878, %v877
    %v888 = vpack.c.b16 %v880, %v879
    %897 = vmatprep.subr.bf16.mxu0 0
    %898 = vmatpush1.bf16.msra.mxu0 %v888
    %899 = vmatprep.subr.bf16.mxu0 0
    %900 = vmatpush1.bf16.msra.mxu0 %v887
    %901 = vmatprep.subr.bf16.mxu0 0
    %902 = vmatpush1.bf16.msra.mxu0 %v886
    %903 = vmatprep.subr.bf16.mxu0 0
    %904 = vmatpush1.bf16.msra.mxu0 %v885
    %905 = vmatprep.subr.bf16.mxu0 0
    %906 = vmatpush1.bf16.msra.mxu0 %v884
    %907 = vmatprep.subr.bf16.mxu0 0
    %908 = vmatpush1.bf16.msra.mxu0 %v883
    %909 = vmatprep.subr.bf16.mxu0 0
    %910 = vmatpush1.bf16.msra.mxu0 %v882
    %911 = vmatprep.subr.bf16.mxu0 0
    %912 = vmatpush1.bf16.msra.mxu0 %v881
    %913 = vmatprep.subr.bf16.mxu0 0
    %914 = vmatpush2.bf16.msra.mxu0 0
    %915 = vmatprep.subr.bf16.mxu0 0
    %916 = vmatpush2.bf16.msra.mxu0 0
    %917 = vmatprep.subr.bf16.mxu0 0
    %918 = vmatpush2.bf16.msra.mxu0 0
    %919 = vmatprep.subr.bf16.mxu0 0
    %920 = vmatpush2.bf16.msra.mxu0 0
    %921 = vmatprep.subr.bf16.mxu0 0
    %922 = vmatpush2.bf16.msra.mxu0 0
    %923 = vmatprep.subr.bf16.mxu0 0
    %924 = vmatpush2.bf16.msra.mxu0 0
    %925 = vmatprep.subr.bf16.mxu0 0
    %926 = vmatpush2.bf16.msra.mxu0 0
    %927 = vmatprep.subr.bf16.mxu0 0
    %928 = vmatpush2.bf16.msra.mxu0 0
    %929 = vmatprep.mubr.bf16.mxu0 0
    %930 = vmatmul.mubr.bf16.gmra.mxu0 %v817
    %v931 = vpop.f32.mrf.mxu0
    %v932 = vadd.f32 0.0, %v931
    %v933 = vpop.f32.mrf.mxu0
    %v934 = vpop.f32.mrf.mxu0
    %v935 = vadd.f32 0.0, %v934
    %v936 = vpop.f32.mrf.mxu0
    %937 = vmatprep.mubr.bf16.mxu0 0
    %938 = vmatmul.mubr.bf16.gmra.mxu0 %v818
    %v939 = vpop.f32.mrf.mxu0
    %v940 = vadd.f32 0.0, %v939
    %v941 = vpop.f32.mrf.mxu0
    %v942 = vpop.f32.mrf.mxu0
    %v943 = vadd.f32 0.0, %v942
    %v944 = vpop.f32.mrf.mxu0
    %945 = vmatprep.mubr.bf16.mxu0 0
    %946 = vmatmul.mubr.bf16.gmra.mxu0 %v819
    %v947 = vpop.f32.mrf.mxu0
    %v948 = vadd.f32 0.0, %v947
    %v949 = vpop.f32.mrf.mxu0
    %v950 = vpop.f32.mrf.mxu0
    %v951 = vadd.f32 0.0, %v950
    %v952 = vpop.f32.mrf.mxu0
    %953 = vmatprep.mubr.bf16.mxu0 0
    %954 = vmatmul.mubr.bf16.gmra.mxu0 %v820
    %v955 = vpop.f32.mrf.mxu0
    %v956 = vadd.f32 0.0, %v955
    %v957 = vpop.f32.mrf.mxu0
    %v958 = vpop.f32.mrf.mxu0
    %v959 = vadd.f32 0.0, %v958
    %v960 = vpop.f32.mrf.mxu0
    %961 = vmatprep.mubr.bf16.mxu0 0
    %962 = vmatmul.mubr.bf16.gmra.mxu0 %v821
    %v963 = vpop.f32.mrf.mxu0
    %v964 = vadd.f32 0.0, %v963
    %v965 = vpop.f32.mrf.mxu0
    %v966 = vpop.f32.mrf.mxu0
    %v967 = vadd.f32 0.0, %v966
    %v968 = vpop.f32.mrf.mxu0
    %969 = vmatprep.mubr.bf16.mxu0 0
    %970 = vmatmul.mubr.bf16.gmra.mxu0 %v822
    %v971 = vpop.f32.mrf.mxu0
    %v972 = vadd.f32 0.0, %v971
    %v973 = vpop.f32.mrf.mxu0
    %v974 = vpop.f32.mrf.mxu0
    %v975 = vadd.f32 0.0, %v974
    %v976 = vpop.f32.mrf.mxu0
    %977 = vmatprep.mubr.bf16.mxu0 0
    %978 = vmatmul.mubr.bf16.gmra.mxu0 %v823
    %v979 = vpop.f32.mrf.mxu0
    %v980 = vadd.f32 0.0, %v979
    %v981 = vpop.f32.mrf.mxu0
    %v982 = vpop.f32.mrf.mxu0
    %v983 = vadd.f32 0.0, %v982
    %v984 = vpop.f32.mrf.mxu0
    %985 = vmatprep.mubr.bf16.mxu0 0
    %986 = vmatmul.mubr.bf16.gmra.mxu0 %v824
    %v987 = vpop.f32.mrf.mxu0
    %v988 = vadd.f32 0.0, %v987
    %v989 = vpop.f32.mrf.mxu0
    %v990 = vpop.f32.mrf.mxu0
    %v991 = vadd.f32 0.0, %v990
    %v992 = vpop.f32.mrf.mxu0
    %993 = vmatprep.mubr.bf16.mxu0 0
    %994 = vmatmul.mubr.bf16.gmra.mxu0 %v825
    %v995 = vpop.f32.mrf.mxu0
    %v996 = vadd.f32 0.0, %v995
    %v997 = vpop.f32.mrf.mxu0
    %v998 = vpop.f32.mrf.mxu0
    %v999 = vadd.f32 0.0, %v998
    %v1000 = vpop.f32.mrf.mxu0
    %1001 = vmatprep.mubr.bf16.mxu0 0
    %1002 = vmatmul.mubr.bf16.gmra.mxu0 %v826
    %v1003 = vpop.f32.mrf.mxu0
    %v1004 = vadd.f32 0.0, %v1003
    %v1005 = vpop.f32.mrf.mxu0
    %v1006 = vpop.f32.mrf.mxu0
    %v1007 = vadd.f32 0.0, %v1006
    %v1008 = vpop.f32.mrf.mxu0
    %1009 = vmatprep.mubr.bf16.mxu0 0
    %1010 = vmatmul.mubr.bf16.gmra.mxu0 %v827
    %v1011 = vpop.f32.mrf.mxu0
    %v1012 = vadd.f32 0.0, %v1011
    %v1013 = vpop.f32.mrf.mxu0
    %v1014 = vpop.f32.mrf.mxu0
    %v1015 = vadd.f32 0.0, %v1014
    %v1016 = vpop.f32.mrf.mxu0
    %1017 = vmatprep.mubr.bf16.mxu0 0
    %1018 = vmatmul.mubr.bf16.gmra.mxu0 %v828
    %v1019 = vpop.f32.mrf.mxu0
    %v1020 = vadd.f32 0.0, %v1019
    %v1021 = vpop.f32.mrf.mxu0
    %v1022 = vpop.f32.mrf.mxu0
    %v1023 = vadd.f32 0.0, %v1022
    %v1024 = vpop.f32.mrf.mxu0
    %1025 = vmatprep.mubr.bf16.mxu0 0
    %1026 = vmatmul.mubr.bf16.gmra.mxu0 %v829
    %v1027 = vpop.f32.mrf.mxu0
    %v1028 = vadd.f32 0.0, %v1027
    %v1029 = vpop.f32.mrf.mxu0
    %v1030 = vpop.f32.mrf.mxu0
    %v1031 = vadd.f32 0.0, %v1030
    %v1032 = vpop.f32.mrf.mxu0
    %1033 = vmatprep.mubr.bf16.mxu0 0
    %1034 = vmatmul.mubr.bf16.gmra.mxu0 %v830
    %v1035 = vpop.f32.mrf.mxu0
    %v1036 = vadd.f32 0.0, %v1035
    %v1037 = vpop.f32.mrf.mxu0
    %v1038 = vpop.f32.mrf.mxu0
    %v1039 = vadd.f32 0.0, %v1038
    %v1040 = vpop.f32.mrf.mxu0
    %1041 = vmatprep.mubr.bf16.mxu0 0
    %1042 = vmatmul.mubr.bf16.gmra.mxu0 %v831
    %v1043 = vpop.f32.mrf.mxu0
    %v1044 = vadd.f32 0.0, %v1043
    %v1045 = vpop.f32.mrf.mxu0
    %v1046 = vpop.f32.mrf.mxu0
    %v1047 = vadd.f32 0.0, %v1046
    %v1048 = vpop.f32.mrf.mxu0
    %1049 = vmatprep.mubr.bf16.mxu0 0
    %1050 = vmatmul.mubr.bf16.gmra.mxu0 %v832
    %v1051 = vpop.f32.mrf.mxu0
    %v1052 = vadd.f32 0.0, %v1051
    %v1053 = vpop.f32.mrf.mxu0
    %v1054 = vpop.f32.mrf.mxu0
    %v1055 = vadd.f32 0.0, %v1054
    %v1056 = vpop.f32.mrf.mxu0
    %1057 = vdwg.mxu0
    %v1058 = vpack.c.bf16 %v935, %v932
    %v1059 = vpack.c.bf16 %v943, %v940
    %v1060 = vpack.c.bf16 %v951, %v948
    %v1061 = vpack.c.bf16 %v959, %v956
    %v1062 = vpack.c.bf16 %v967, %v964
    %v1063 = vpack.c.bf16 %v975, %v972
    %v1064 = vpack.c.bf16 %v983, %v980
    %v1065 = vpack.c.bf16 %v991, %v988
    %v1066 = vpack.c.bf16 %v999, %v996
    %v1067 = vpack.c.bf16 %v1007, %v1004
    %v1068 = vpack.c.bf16 %v1015, %v1012
    %v1069 = vpack.c.bf16 %v1023, %v1020
    %v1070 = vpack.c.bf16 %v1031, %v1028
    %v1071 = vpack.c.bf16 %v1039, %v1036
    %v1072 = vpack.c.bf16 %v1047, %v1044
    %v1073 = vpack.c.bf16 %v1055, %v1052
    %v1074 = vld [vmem:[%s5] sm:$0x1]
    %v1076 = vlaneseq
    %v1077 = vshrl.u32 %v1076, 7
    %v1078 = vsub.s32 0, %v1077
    %v1079 = vrot.slane %v1074, %v1078
    %1081 = vmatprep.subr.bf16.mxu0 0
    %1082 = vmatpush1.bf16.msra.mxu0 %v1065
    %1083 = vmatprep.subr.bf16.mxu0 0
    %1084 = vmatpush1.bf16.msra.mxu0 %v1064
    %1085 = vmatprep.subr.bf16.mxu0 0
    %1086 = vmatpush1.bf16.msra.mxu0 %v1063
    %1087 = vmatprep.subr.bf16.mxu0 0
    %1088 = vmatpush1.bf16.msra.mxu0 %v1062
    %1089 = vmatprep.subr.bf16.mxu0 0
    %1090 = vmatpush1.bf16.msra.mxu0 %v1061
    %1091 = vmatprep.subr.bf16.mxu0 0
    %1092 = vmatpush1.bf16.msra.mxu0 %v1060
    %1093 = vmatprep.subr.bf16.mxu0 0
    %1094 = vmatpush1.bf16.msra.mxu0 %v1059
    %1095 = vmatprep.subr.bf16.mxu0 0
    %1096 = vmatpush1.bf16.msra.mxu0 %v1058
    %1097 = vmatprep.subr.bf16.mxu0 0
    %1098 = vmatpush2.bf16.msra.mxu0 %v1073
    %1099 = vmatprep.subr.bf16.mxu0 0
    %1100 = vmatpush2.bf16.msra.mxu0 %v1072
    %1101 = vmatprep.subr.bf16.mxu0 0
    %1102 = vmatpush2.bf16.msra.mxu0 %v1071
    %1103 = vmatprep.subr.bf16.mxu0 0
    %1104 = vmatpush2.bf16.msra.mxu0 %v1070
    %1105 = vmatprep.subr.bf16.mxu0 0
    %1106 = vmatpush2.bf16.msra.mxu0 %v1069
    %1107 = vmatprep.subr.bf16.mxu0 0
    %1108 = vmatpush2.bf16.msra.mxu0 %v1068
    %1109 = vmatprep.subr.bf16.mxu0 0
    %1110 = vmatpush2.bf16.msra.mxu0 %v1067
    %1111 = vmatprep.subr.bf16.mxu0 0
    %1112 = vmatpush2.bf16.msra.mxu0 %v1066
    %1113 = vmatprep.mubr.bf16.mxu0 %v200
    %1114 = vmatmul.mubr.bf16.gmra.mxu0 %v199
    %v1115 = vpop.f32.mrf.mxu0
    %v1116 = vadd.f32 %v1079, %v1115
    %v1117 = vpop.f32.mrf.mxu0
    %v1118 = vpop.f32.mrf.mxu0
    %v1119 = vadd.f32 %v1079, %v1118
    %v1120 = vpop.f32.mrf.mxu0
    %1121 = vmatprep.mubr.bf16.mxu0 %v202
    %1122 = vmatmul.mubr.bf16.gmra.mxu0 %v201
    %v1123 = vpop.f32.mrf.mxu0
    %v1124 = vadd.f32 %v1079, %v1123
    %v1125 = vpop.f32.mrf.mxu0
    %v1126 = vpop.f32.mrf.mxu0
    %v1127 = vadd.f32 %v1079, %v1126
    %v1128 = vpop.f32.mrf.mxu0
    %1129 = vmatprep.mubr.bf16.mxu0 %v204
    %1130 = vmatmul.mubr.bf16.gmra.mxu0 %v203
    %v1131 = vpop.f32.mrf.mxu0
    %v1132 = vadd.f32 %v1079, %v1131
    %v1133 = vpop.f32.mrf.mxu0
    %v1134 = vpop.f32.mrf.mxu0
    %v1135 = vadd.f32 %v1079, %v1134
    %v1136 = vpop.f32.mrf.mxu0
    %1137 = vmatprep.mubr.bf16.mxu0 %v206
    %1138 = vmatmul.mubr.bf16.gmra.mxu0 %v205
    %v1139 = vpop.f32.mrf.mxu0
    %v1140 = vadd.f32 %v1079, %v1139
    %v1141 = vpop.f32.mrf.mxu0
    %v1142 = vpop.f32.mrf.mxu0
    %v1143 = vadd.f32 %v1079, %v1142
    %v1144 = vpop.f32.mrf.mxu0
    %1145 = vmatprep.mubr.bf16.mxu0 %v208
    %1146 = vmatmul.mubr.bf16.gmra.mxu0 %v207
    %v1147 = vpop.f32.mrf.mxu0
    %v1148 = vadd.f32 %v1079, %v1147
    %v1149 = vpop.f32.mrf.mxu0
    %v1150 = vpop.f32.mrf.mxu0
    %v1151 = vadd.f32 %v1079, %v1150
    %v1152 = vpop.f32.mrf.mxu0
    %1153 = vmatprep.mubr.bf16.mxu0 %v210
    %1154 = vmatmul.mubr.bf16.gmra.mxu0 %v209
    %v1155 = vpop.f32.mrf.mxu0
    %v1156 = vadd.f32 %v1079, %v1155
    %v1157 = vpop.f32.mrf.mxu0
    %v1158 = vpop.f32.mrf.mxu0
    %v1159 = vadd.f32 %v1079, %v1158
    %v1160 = vpop.f32.mrf.mxu0
    %1161 = vmatprep.mubr.bf16.mxu0 %v212
    %1162 = vmatmul.mubr.bf16.gmra.mxu0 %v211
    %v1163 = vpop.f32.mrf.mxu0
    %v1164 = vadd.f32 %v1079, %v1163
    %v1165 = vpop.f32.mrf.mxu0
    %v1166 = vpop.f32.mrf.mxu0
    %v1167 = vadd.f32 %v1079, %v1166
    %v1168 = vpop.f32.mrf.mxu0
    %1169 = vmatprep.mubr.bf16.mxu0 %v214
    %1170 = vmatmul.mubr.bf16.gmra.mxu0 %v213
    %v1171 = vpop.f32.mrf.mxu0
    %v1172 = vadd.f32 %v1079, %v1171
    %v1173 = vpop.f32.mrf.mxu0
    %v1174 = vpop.f32.mrf.mxu0
    %v1175 = vadd.f32 %v1079, %v1174
    %v1176 = vpop.f32.mrf.mxu0
    %1177 = vmatprep.mubr.bf16.mxu0 %v216
    %1178 = vmatmul.mubr.bf16.gmra.mxu0 %v215
    %v1179 = vpop.f32.mrf.mxu0
    %v1180 = vadd.f32 %v1079, %v1179
    %v1181 = vpop.f32.mrf.mxu0
    %v1182 = vpop.f32.mrf.mxu0
    %v1183 = vadd.f32 %v1079, %v1182
    %v1184 = vpop.f32.mrf.mxu0
    %1185 = vmatprep.mubr.bf16.mxu0 %v218
    %1186 = vmatmul.mubr.bf16.gmra.mxu0 %v217
    %v1187 = vpop.f32.mrf.mxu0
    %v1188 = vadd.f32 %v1079, %v1187
    %v1189 = vpop.f32.mrf.mxu0
    %v1190 = vpop.f32.mrf.mxu0
    %v1191 = vadd.f32 %v1079, %v1190
    %v1192 = vpop.f32.mrf.mxu0
    %1193 = vmatprep.mubr.bf16.mxu0 %v220
    %1194 = vmatmul.mubr.bf16.gmra.mxu0 %v219
    %v1195 = vpop.f32.mrf.mxu0
    %v1196 = vadd.f32 %v1079, %v1195
    %v1197 = vpop.f32.mrf.mxu0
    %v1198 = vpop.f32.mrf.mxu0
    %v1199 = vadd.f32 %v1079, %v1198
    %v1200 = vpop.f32.mrf.mxu0
    %1201 = vmatprep.mubr.bf16.mxu0 %v222
    %1202 = vmatmul.mubr.bf16.gmra.mxu0 %v221
    %v1203 = vpop.f32.mrf.mxu0
    %v1204 = vadd.f32 %v1079, %v1203
    %v1205 = vpop.f32.mrf.mxu0
    %v1206 = vpop.f32.mrf.mxu0
    %v1207 = vadd.f32 %v1079, %v1206
    %v1208 = vpop.f32.mrf.mxu0
    %1209 = vmatprep.mubr.bf16.mxu0 %v224
    %1210 = vmatmul.mubr.bf16.gmra.mxu0 %v223
    %v1211 = vpop.f32.mrf.mxu0
    %v1212 = vadd.f32 %v1079, %v1211
    %v1213 = vpop.f32.mrf.mxu0
    %v1214 = vpop.f32.mrf.mxu0
    %v1215 = vadd.f32 %v1079, %v1214
    %v1216 = vpop.f32.mrf.mxu0
    %1217 = vmatprep.mubr.bf16.mxu0 %v226
    %1218 = vmatmul.mubr.bf16.gmra.mxu0 %v225
    %v1219 = vpop.f32.mrf.mxu0
    %v1220 = vadd.f32 %v1079, %v1219
    %v1221 = vpop.f32.mrf.mxu0
    %v1222 = vpop.f32.mrf.mxu0
    %v1223 = vadd.f32 %v1079, %v1222
    %v1224 = vpop.f32.mrf.mxu0
    %1225 = vmatprep.mubr.bf16.mxu0 %v228
    %1226 = vmatmul.mubr.bf16.gmra.mxu0 %v227
    %v1227 = vpop.f32.mrf.mxu0
    %v1228 = vadd.f32 %v1079, %v1227
    %v1229 = vpop.f32.mrf.mxu0
    %v1230 = vpop.f32.mrf.mxu0
    %v1231 = vadd.f32 %v1079, %v1230
    %v1232 = vpop.f32.mrf.mxu0
    %1233 = vmatprep.mubr.bf16.mxu0 %v230
    %1234 = vmatmul.mubr.bf16.gmra.mxu0 %v229
    %v1235 = vpop.f32.mrf.mxu0
    %v1236 = vadd.f32 %v1079, %v1235
    %v1237 = vpop.f32.mrf.mxu0
    %v1238 = vpop.f32.mrf.mxu0
    %v1239 = vadd.f32 %v1079, %v1238
    %v1240 = vpop.f32.mrf.mxu0
    %1241 = vdwg.mxu0
    %v1242 = vmax.f32 %v1116, 0.0
    %v1243 = vmax.f32 %v1119, 0.0
    %v1244 = vmax.f32 %v1124, 0.0
    %v1245 = vmax.f32 %v1127, 0.0
    %v1246 = vmax.f32 %v1132, 0.0
    %v1247 = vmax.f32 %v1135, 0.0
    %v1248 = vmax.f32 %v1140, 0.0
    %v1249 = vmax.f32 %v1143, 0.0
    %v1250 = vmax.f32 %v1148, 0.0
    %v1251 = vmax.f32 %v1151, 0.0
    %v1252 = vmax.f32 %v1156, 0.0
    %v1253 = vmax.f32 %v1159, 0.0
    %v1254 = vmax.f32 %v1164, 0.0
    %v1255 = vmax.f32 %v1167, 0.0
    %v1256 = vmax.f32 %v1172, 0.0
    %v1257 = vmax.f32 %v1175, 0.0
    %v1258 = vmax.f32 %v1180, 0.0
    %v1259 = vmax.f32 %v1183, 0.0
    %v1260 = vmax.f32 %v1188, 0.0
    %v1261 = vmax.f32 %v1191, 0.0
    %v1262 = vmax.f32 %v1196, 0.0
    %v1263 = vmax.f32 %v1199, 0.0
    %v1264 = vmax.f32 %v1204, 0.0
    %v1265 = vmax.f32 %v1207, 0.0
    %v1266 = vmax.f32 %v1212, 0.0
    %v1267 = vmax.f32 %v1215, 0.0
    %v1268 = vmax.f32 %v1220, 0.0
    %v1269 = vmax.f32 %v1223, 0.0
    %v1270 = vmax.f32 %v1228, 0.0
    %v1271 = vmax.f32 %v1231, 0.0
    %v1272 = vmax.f32 %v1236, 0.0
    %v1273 = vmax.f32 %v1239, 0.0
    %v1274 = vpack.c.bf16 %v1243, %v1242
    %v1275 = vpack.c.bf16 %v1245, %v1244
    %v1276 = vpack.c.bf16 %v1247, %v1246
    %v1277 = vpack.c.bf16 %v1249, %v1248
    %v1278 = vpack.c.bf16 %v1251, %v1250
    %v1279 = vpack.c.bf16 %v1253, %v1252
    %v1280 = vpack.c.bf16 %v1255, %v1254
    %v1281 = vpack.c.bf16 %v1257, %v1256
    %v1282 = vpack.c.bf16 %v1259, %v1258
    %v1283 = vpack.c.bf16 %v1261, %v1260
    %v1284 = vpack.c.bf16 %v1263, %v1262
    %v1285 = vpack.c.bf16 %v1265, %v1264
    %v1286 = vpack.c.bf16 %v1267, %v1266
    %v1287 = vpack.c.bf16 %v1269, %v1268
    %v1288 = vpack.c.bf16 %v1271, %v1270
    %v1289 = vpack.c.bf16 %v1273, %v1272
    %1290 = vmatprep.subr.bf16.mxu0 0
    %1291 = vmatpush1.bf16.msra.mxu0 %v1281
    %1292 = vmatprep.subr.bf16.mxu0 0
    %1293 = vmatpush1.bf16.msra.mxu0 %v1280
    %1294 = vmatprep.subr.bf16.mxu0 0
    %1295 = vmatpush1.bf16.msra.mxu0 %v1279
    %1296 = vmatprep.subr.bf16.mxu0 0
    %1297 = vmatpush1.bf16.msra.mxu0 %v1278
    %1298 = vmatprep.subr.bf16.mxu0 0
    %1299 = vmatpush1.bf16.msra.mxu0 %v1277
    %1300 = vmatprep.subr.bf16.mxu0 0
    %1301 = vmatpush1.bf16.msra.mxu0 %v1276
    %1302 = vmatprep.subr.bf16.mxu0 0
    %1303 = vmatpush1.bf16.msra.mxu0 %v1275
    %1304 = vmatprep.subr.bf16.mxu0 0
    %1305 = vmatpush1.bf16.msra.mxu0 %v1274
    %1306 = vmatprep.subr.bf16.mxu0 0
    %1307 = vmatpush2.bf16.msra.mxu0 %v1289
    %1308 = vmatprep.subr.bf16.mxu0 0
    %1309 = vmatpush2.bf16.msra.mxu0 %v1288
    %1310 = vmatprep.subr.bf16.mxu0 0
    %1311 = vmatpush2.bf16.msra.mxu0 %v1287
    %1312 = vmatprep.subr.bf16.mxu0 0
    %1313 = vmatpush2.bf16.msra.mxu0 %v1286
    %1314 = vmatprep.subr.bf16.mxu0 0
    %1315 = vmatpush2.bf16.msra.mxu0 %v1285
    %1316 = vmatprep.subr.bf16.mxu0 0
    %1317 = vmatpush2.bf16.msra.mxu0 %v1284
    %1318 = vmatprep.subr.bf16.mxu0 0
    %1319 = vmatpush2.bf16.msra.mxu0 %v1283
    %1320 = vmatprep.subr.bf16.mxu0 0
    %1321 = vmatpush2.bf16.msra.mxu0 %v1282
    %1322 = vmatprep.mubr.bf16.mxu0 %v200
    %1323 = vmatmul.mubr.bf16.gmra.mxu0 %v199
    %v1324 = vpop.f32.mrf.mxu0
    %v1325 = vadd.f32 0.0, %v1324
    %v1326 = vpop.f32.mrf.mxu0
    %v1327 = vpop.f32.mrf.mxu0
    %v1328 = vadd.f32 0.0, %v1327
    %v1329 = vpop.f32.mrf.mxu0
    %1330 = vmatprep.mubr.bf16.mxu0 %v202
    %1331 = vmatmul.mubr.bf16.gmra.mxu0 %v201
    %v1332 = vpop.f32.mrf.mxu0
    %v1333 = vadd.f32 0.0, %v1332
    %v1334 = vpop.f32.mrf.mxu0
    %v1335 = vpop.f32.mrf.mxu0
    %v1336 = vadd.f32 0.0, %v1335
    %v1337 = vpop.f32.mrf.mxu0
    %1338 = vmatprep.mubr.bf16.mxu0 %v204
    %1339 = vmatmul.mubr.bf16.gmra.mxu0 %v203
    %v1340 = vpop.f32.mrf.mxu0
    %v1341 = vadd.f32 0.0, %v1340
    %v1342 = vpop.f32.mrf.mxu0
    %v1343 = vpop.f32.mrf.mxu0
    %v1344 = vadd.f32 0.0, %v1343
    %v1345 = vpop.f32.mrf.mxu0
    %1346 = vmatprep.mubr.bf16.mxu0 %v206
    %1347 = vmatmul.mubr.bf16.gmra.mxu0 %v205
    %v1348 = vpop.f32.mrf.mxu0
    %v1349 = vadd.f32 0.0, %v1348
    %v1350 = vpop.f32.mrf.mxu0
    %v1351 = vpop.f32.mrf.mxu0
    %v1352 = vadd.f32 0.0, %v1351
    %v1353 = vpop.f32.mrf.mxu0
    %1354 = vmatprep.mubr.bf16.mxu0 %v208
    %1355 = vmatmul.mubr.bf16.gmra.mxu0 %v207
    %v1356 = vpop.f32.mrf.mxu0
    %v1357 = vadd.f32 0.0, %v1356
    %v1358 = vpop.f32.mrf.mxu0
    %v1359 = vpop.f32.mrf.mxu0
    %v1360 = vadd.f32 0.0, %v1359
    %v1361 = vpop.f32.mrf.mxu0
    %1362 = vmatprep.mubr.bf16.mxu0 %v210
    %1363 = vmatmul.mubr.bf16.gmra.mxu0 %v209
    %v1364 = vpop.f32.mrf.mxu0
    %v1365 = vadd.f32 0.0, %v1364
    %v1366 = vpop.f32.mrf.mxu0
    %v1367 = vpop.f32.mrf.mxu0
    %v1368 = vadd.f32 0.0, %v1367
    %v1369 = vpop.f32.mrf.mxu0
    %1370 = vmatprep.mubr.bf16.mxu0 %v212
    %1371 = vmatmul.mubr.bf16.gmra.mxu0 %v211
    %v1372 = vpop.f32.mrf.mxu0
    %v1373 = vadd.f32 0.0, %v1372
    %v1374 = vpop.f32.mrf.mxu0
    %v1375 = vpop.f32.mrf.mxu0
    %v1376 = vadd.f32 0.0, %v1375
    %v1377 = vpop.f32.mrf.mxu0
    %1378 = vmatprep.mubr.bf16.mxu0 %v214
    %1379 = vmatmul.mubr.bf16.gmra.mxu0 %v213
    %v1380 = vpop.f32.mrf.mxu0
    %v1381 = vadd.f32 0.0, %v1380
    %v1382 = vpop.f32.mrf.mxu0
    %v1383 = vpop.f32.mrf.mxu0
    %v1384 = vadd.f32 0.0, %v1383
    %v1385 = vpop.f32.mrf.mxu0
    %1386 = vmatprep.mubr.bf16.mxu0 %v216
    %1387 = vmatmul.mubr.bf16.gmra.mxu0 %v215
    %v1388 = vpop.f32.mrf.mxu0
    %v1389 = vadd.f32 0.0, %v1388
    %v1390 = vpop.f32.mrf.mxu0
    %v1391 = vpop.f32.mrf.mxu0
    %v1392 = vadd.f32 0.0, %v1391
    %v1393 = vpop.f32.mrf.mxu0
    %1394 = vmatprep.mubr.bf16.mxu0 %v218
    %1395 = vmatmul.mubr.bf16.gmra.mxu0 %v217
    %v1396 = vpop.f32.mrf.mxu0
    %v1397 = vadd.f32 0.0, %v1396
    %v1398 = vpop.f32.mrf.mxu0
    %v1399 = vpop.f32.mrf.mxu0
    %v1400 = vadd.f32 0.0, %v1399
    %v1401 = vpop.f32.mrf.mxu0
    %1402 = vmatprep.mubr.bf16.mxu0 %v220
    %1403 = vmatmul.mubr.bf16.gmra.mxu0 %v219
    %v1404 = vpop.f32.mrf.mxu0
    %v1405 = vadd.f32 0.0, %v1404
    %v1406 = vpop.f32.mrf.mxu0
    %v1407 = vpop.f32.mrf.mxu0
    %v1408 = vadd.f32 0.0, %v1407
    %v1409 = vpop.f32.mrf.mxu0
    %1410 = vmatprep.mubr.bf16.mxu0 %v222
    %1411 = vmatmul.mubr.bf16.gmra.mxu0 %v221
    %v1412 = vpop.f32.mrf.mxu0
    %v1413 = vadd.f32 0.0, %v1412
    %v1414 = vpop.f32.mrf.mxu0
    %v1415 = vpop.f32.mrf.mxu0
    %v1416 = vadd.f32 0.0, %v1415
    %v1417 = vpop.f32.mrf.mxu0
    %1418 = vmatprep.mubr.bf16.mxu0 %v224
    %1419 = vmatmul.mubr.bf16.gmra.mxu0 %v223
    %v1420 = vpop.f32.mrf.mxu0
    %v1421 = vadd.f32 0.0, %v1420
    %v1422 = vpop.f32.mrf.mxu0
    %v1423 = vpop.f32.mrf.mxu0
    %v1424 = vadd.f32 0.0, %v1423
    %v1425 = vpop.f32.mrf.mxu0
    %1426 = vmatprep.mubr.bf16.mxu0 %v226
    %1427 = vmatmul.mubr.bf16.gmra.mxu0 %v225
    %v1428 = vpop.f32.mrf.mxu0
    %v1429 = vadd.f32 0.0, %v1428
    %v1430 = vpop.f32.mrf.mxu0
    %v1431 = vpop.f32.mrf.mxu0
    %v1432 = vadd.f32 0.0, %v1431
    %v1433 = vpop.f32.mrf.mxu0
    %1434 = vmatprep.mubr.bf16.mxu0 %v228
    %1435 = vmatmul.mubr.bf16.gmra.mxu0 %v227
    %v1436 = vpop.f32.mrf.mxu0
    %v1437 = vadd.f32 0.0, %v1436
    %v1438 = vpop.f32.mrf.mxu0
    %v1439 = vpop.f32.mrf.mxu0
    %v1440 = vadd.f32 0.0, %v1439
    %v1441 = vpop.f32.mrf.mxu0
    %1442 = vmatprep.mubr.bf16.mxu0 %v230
    %1443 = vmatmul.mubr.bf16.gmra.mxu0 %v229
    %v1444 = vpop.f32.mrf.mxu0
    %v1445 = vadd.f32 0.0, %v1444
    %v1446 = vpop.f32.mrf.mxu0
    %v1447 = vpop.f32.mrf.mxu0
    %v1448 = vadd.f32 0.0, %v1447
    %v1449 = vpop.f32.mrf.mxu0
    %1450 = vdwg.mxu0
    %v1451 = vpack.c.bf16 %v1328, %v1325
    %v1452 = vpack.c.bf16 %v1336, %v1333
    %v1453 = vpack.c.bf16 %v1344, %v1341
    %v1454 = vpack.c.bf16 %v1352, %v1349
    %v1455 = vpack.c.bf16 %v1360, %v1357
    %v1456 = vpack.c.bf16 %v1368, %v1365
    %v1457 = vpack.c.bf16 %v1376, %v1373
    %v1458 = vpack.c.bf16 %v1384, %v1381
    %v1459 = vpack.c.bf16 %v1392, %v1389
    %v1460 = vpack.c.bf16 %v1400, %v1397
    %v1461 = vpack.c.bf16 %v1408, %v1405
    %v1462 = vpack.c.bf16 %v1416, %v1413
    %v1463 = vpack.c.bf16 %v1424, %v1421
    %v1464 = vpack.c.bf16 %v1432, %v1429
    %v1465 = vpack.c.bf16 %v1440, %v1437
    %v1466 = vpack.c.bf16 %v1448, %v1445
    %v1467 = vld [vmem:[%s6] sm:$0xff]
    %v1468 = vld [vmem:[%s6 + $0x8] sm:$0xff]
    %v1469 = vld [vmem:[%s6 + $0x10] sm:$0xff]
    %v1470 = vld [vmem:[%s6 + $0x18] sm:$0xff]
    %v1471 = vld [vmem:[%s6 + $0x20] sm:$0xff]
    %v1472 = vld [vmem:[%s6 + $0x28] sm:$0xff]
    %v1473 = vld [vmem:[%s6 + $0x30] sm:$0xff]
    %v1474 = vld [vmem:[%s6 + $0x38] sm:$0xff]
    %v1475 = vld [vmem:[%s7] sm:$0x3]
    %v1477 = vlaneseq
    %v1478 = vshrl.u32 %v1477, 7
    %v1479 = vsub.s32 0, %v1478
    %v1480 = vrot.slane %v1475, %v1479
    %v1481 = vlaneseq
    %v1482 = vshrl.u32 %v1481, 7
    %v1483 = vsub.s32 1, %v1482
    %v1484 = vrot.slane %v1475, %v1483
    %v1495 = vunpack.c.l.b16 %v1467
    %v1496 = vunpack.c.h.b16 %v1467
    %v1497 = vunpack.c.l.b16 %v1468
    %v1498 = vunpack.c.h.b16 %v1468
    %v1499 = vunpack.c.l.b16 %v1469
    %v1500 = vunpack.c.h.b16 %v1469
    %v1501 = vunpack.c.l.b16 %v1470
    %v1502 = vunpack.c.h.b16 %v1470
    %v1503 = vunpack.c.l.b16 %v1471
    %v1504 = vunpack.c.h.b16 %v1471
    %v1505 = vunpack.c.l.b16 %v1472
    %v1506 = vunpack.c.h.b16 %v1472
    %v1507 = vunpack.c.l.b16 %v1473
    %v1508 = vunpack.c.h.b16 %v1473
    %v1509 = vunpack.c.l.b16 %v1474
    %v1510 = vunpack.c.h.b16 %v1474
    %v1511 = vpack.c.b16 %v1497, %v1495
    %v1512 = vpack.c.b16 %v1498, %v1496
    %v1513 = vpack.c.b16 %v1501, %v1499
    %v1514 = vpack.c.b16 %v1502, %v1500
    %v1515 = vpack.c.b16 %v1505, %v1503
    %v1516 = vpack.c.b16 %v1506, %v1504
    %v1517 = vpack.c.b16 %v1509, %v1507
    %v1518 = vpack.c.b16 %v1510, %v1508
    %v1528 = vsel %vm575, %v1451, 0
    %v1531 = vsel %vm575, %v1452, 0
    %v1534 = vsel %vm575, %v1453, 0
    %v1537 = vsel %vm575, %v1454, 0
    %v1540 = vsel %vm575, %v1455, 0
    %v1543 = vsel %vm575, %v1456, 0
    %v1546 = vsel %vm575, %v1457, 0
    %v1549 = vsel %vm575, %v1458, 0
    %v1552 = vsel %vm575, %v1459, 0
    %v1555 = vsel %vm575, %v1460, 0
    %v1558 = vsel %vm575, %v1461, 0
    %v1561 = vsel %vm575, %v1462, 0
    %v1564 = vsel %vm575, %v1463, 0
    %v1567 = vsel %vm575, %v1464, 0
    %v1570 = vsel %vm575, %v1465, 0
    %v1573 = vsel %vm575, %v1466, 0
    %1575 = vmatprep.subr.bf16.mxu0 0
    %1576 = vmatpush1.bf16.msra.mxu0 0
    %1577 = vmatprep.subr.bf16.mxu0 0
    %1578 = vmatpush1.bf16.msra.mxu0 0
    %1579 = vmatprep.subr.bf16.mxu0 0
    %1580 = vmatpush1.bf16.msra.mxu0 0
    %1581 = vmatprep.subr.bf16.mxu0 0
    %1582 = vmatpush1.bf16.msra.mxu0 0
    %1583 = vmatprep.subr.bf16.mxu0 %v1518
    %1584 = vmatpush1.bf16.msra.mxu0 %v1517
    %1585 = vmatprep.subr.bf16.mxu0 %v1516
    %1586 = vmatpush1.bf16.msra.mxu0 %v1515
    %1587 = vmatprep.subr.bf16.mxu0 %v1514
    %1588 = vmatpush1.bf16.msra.mxu0 %v1513
    %1589 = vmatprep.subr.bf16.mxu0 %v1512
    %1590 = vmatpush1.bf16.msra.mxu0 %v1511
    %1591 = vmatprep.subr.bf16.mxu0 0
    %1592 = vmatpush2.bf16.msra.mxu0 0
    %1593 = vmatprep.subr.bf16.mxu0 0
    %1594 = vmatpush2.bf16.msra.mxu0 0
    %1595 = vmatprep.subr.bf16.mxu0 0
    %1596 = vmatpush2.bf16.msra.mxu0 0
    %1597 = vmatprep.subr.bf16.mxu0 0
    %1598 = vmatpush2.bf16.msra.mxu0 0
    %1599 = vmatprep.subr.bf16.mxu0 0
    %1600 = vmatpush2.bf16.msra.mxu0 0
    %1601 = vmatprep.subr.bf16.mxu0 0
    %1602 = vmatpush2.bf16.msra.mxu0 0
    %1603 = vmatprep.subr.bf16.mxu0 0
    %1604 = vmatpush2.bf16.msra.mxu0 0
    %1605 = vmatprep.subr.bf16.mxu0 0
    %1606 = vmatpush2.bf16.msra.mxu0 0
    %1607 = vmatprep.mubr.bf16.mxu0 0
    %1608 = vmatmul.mubr.bf16.gmra.mxu0 %v1528
    %v1609 = vpop.f32.mrf.mxu0
    %v1610 = vadd.f32 %v1480, %v1609
    %v1611 = vpop.f32.mrf.mxu0
    %v1612 = vadd.f32 %v1484, %v1611
    %v1613 = vpop.f32.mrf.mxu0
    %v1614 = vadd.f32 %v1480, %v1613
    %v1615 = vpop.f32.mrf.mxu0
    %v1616 = vadd.f32 %v1484, %v1615
    %1617 = vmatprep.mubr.bf16.mxu0 0
    %1618 = vmatmul.mubr.bf16.gmra.mxu0 %v1531
    %v1619 = vpop.f32.mrf.mxu0
    %v1620 = vadd.f32 %v1480, %v1619
    %v1621 = vpop.f32.mrf.mxu0
    %v1622 = vadd.f32 %v1484, %v1621
    %v1623 = vpop.f32.mrf.mxu0
    %v1624 = vadd.f32 %v1480, %v1623
    %v1625 = vpop.f32.mrf.mxu0
    %v1626 = vadd.f32 %v1484, %v1625
    %1627 = vmatprep.mubr.bf16.mxu0 0
    %1628 = vmatmul.mubr.bf16.gmra.mxu0 %v1534
    %v1629 = vpop.f32.mrf.mxu0
    %v1630 = vadd.f32 %v1480, %v1629
    %v1631 = vpop.f32.mrf.mxu0
    %v1632 = vadd.f32 %v1484, %v1631
    %v1633 = vpop.f32.mrf.mxu0
    %v1634 = vadd.f32 %v1480, %v1633
    %v1635 = vpop.f32.mrf.mxu0
    %v1636 = vadd.f32 %v1484, %v1635
    %1637 = vmatprep.mubr.bf16.mxu0 0
    %1638 = vmatmul.mubr.bf16.gmra.mxu0 %v1537
    %v1639 = vpop.f32.mrf.mxu0
    %v1640 = vadd.f32 %v1480, %v1639
    %v1641 = vpop.f32.mrf.mxu0
    %v1642 = vadd.f32 %v1484, %v1641
    %v1643 = vpop.f32.mrf.mxu0
    %v1644 = vadd.f32 %v1480, %v1643
    %v1645 = vpop.f32.mrf.mxu0
    %v1646 = vadd.f32 %v1484, %v1645
    %1647 = vmatprep.mubr.bf16.mxu0 0
    %1648 = vmatmul.mubr.bf16.gmra.mxu0 %v1540
    %v1649 = vpop.f32.mrf.mxu0
    %v1650 = vadd.f32 %v1480, %v1649
    %v1651 = vpop.f32.mrf.mxu0
    %v1652 = vadd.f32 %v1484, %v1651
    %v1653 = vpop.f32.mrf.mxu0
    %v1654 = vadd.f32 %v1480, %v1653
    %v1655 = vpop.f32.mrf.mxu0
    %v1656 = vadd.f32 %v1484, %v1655
    %1657 = vmatprep.mubr.bf16.mxu0 0
    %1658 = vmatmul.mubr.bf16.gmra.mxu0 %v1543
    %v1659 = vpop.f32.mrf.mxu0
    %v1660 = vadd.f32 %v1480, %v1659
    %v1661 = vpop.f32.mrf.mxu0
    %v1662 = vadd.f32 %v1484, %v1661
    %v1663 = vpop.f32.mrf.mxu0
    %v1664 = vadd.f32 %v1480, %v1663
    %v1665 = vpop.f32.mrf.mxu0
    %v1666 = vadd.f32 %v1484, %v1665
    %1667 = vmatprep.mubr.bf16.mxu0 0
    %1668 = vmatmul.mubr.bf16.gmra.mxu0 %v1546
    %v1669 = vpop.f32.mrf.mxu0
    %v1670 = vadd.f32 %v1480, %v1669
    %v1671 = vpop.f32.mrf.mxu0
    %v1672 = vadd.f32 %v1484, %v1671
    %v1673 = vpop.f32.mrf.mxu0
    %v1674 = vadd.f32 %v1480, %v1673
    %v1675 = vpop.f32.mrf.mxu0
    %v1676 = vadd.f32 %v1484, %v1675
    %1677 = vmatprep.mubr.bf16.mxu0 0
    %1678 = vmatmul.mubr.bf16.gmra.mxu0 %v1549
    %v1679 = vpop.f32.mrf.mxu0
    %v1680 = vadd.f32 %v1480, %v1679
    %v1681 = vpop.f32.mrf.mxu0
    %v1682 = vadd.f32 %v1484, %v1681
    %v1683 = vpop.f32.mrf.mxu0
    %v1684 = vadd.f32 %v1480, %v1683
    %v1685 = vpop.f32.mrf.mxu0
    %v1686 = vadd.f32 %v1484, %v1685
    %1687 = vmatprep.mubr.bf16.mxu0 0
    %1688 = vmatmul.mubr.bf16.gmra.mxu0 %v1552
    %v1689 = vpop.f32.mrf.mxu0
    %v1690 = vadd.f32 %v1480, %v1689
    %v1691 = vpop.f32.mrf.mxu0
    %v1692 = vadd.f32 %v1484, %v1691
    %v1693 = vpop.f32.mrf.mxu0
    %v1694 = vadd.f32 %v1480, %v1693
    %v1695 = vpop.f32.mrf.mxu0
    %v1696 = vadd.f32 %v1484, %v1695
    %1697 = vmatprep.mubr.bf16.mxu0 0
    %1698 = vmatmul.mubr.bf16.gmra.mxu0 %v1555
    %v1699 = vpop.f32.mrf.mxu0
    %v1700 = vadd.f32 %v1480, %v1699
    %v1701 = vpop.f32.mrf.mxu0
    %v1702 = vadd.f32 %v1484, %v1701
    %v1703 = vpop.f32.mrf.mxu0
    %v1704 = vadd.f32 %v1480, %v1703
    %v1705 = vpop.f32.mrf.mxu0
    %v1706 = vadd.f32 %v1484, %v1705
    %1707 = vmatprep.mubr.bf16.mxu0 0
    %1708 = vmatmul.mubr.bf16.gmra.mxu0 %v1558
    %v1709 = vpop.f32.mrf.mxu0
    %v1710 = vadd.f32 %v1480, %v1709
    %v1711 = vpop.f32.mrf.mxu0
    %v1712 = vadd.f32 %v1484, %v1711
    %v1713 = vpop.f32.mrf.mxu0
    %v1714 = vadd.f32 %v1480, %v1713
    %v1715 = vpop.f32.mrf.mxu0
    %v1716 = vadd.f32 %v1484, %v1715
    %1717 = vmatprep.mubr.bf16.mxu0 0
    %1718 = vmatmul.mubr.bf16.gmra.mxu0 %v1561
    %v1719 = vpop.f32.mrf.mxu0
    %v1720 = vadd.f32 %v1480, %v1719
    %v1721 = vpop.f32.mrf.mxu0
    %v1722 = vadd.f32 %v1484, %v1721
    %v1723 = vpop.f32.mrf.mxu0
    %v1724 = vadd.f32 %v1480, %v1723
    %v1725 = vpop.f32.mrf.mxu0
    %v1726 = vadd.f32 %v1484, %v1725
    %1727 = vmatprep.mubr.bf16.mxu0 0
    %1728 = vmatmul.mubr.bf16.gmra.mxu0 %v1564
    %v1729 = vpop.f32.mrf.mxu0
    %v1730 = vadd.f32 %v1480, %v1729
    %v1731 = vpop.f32.mrf.mxu0
    %v1732 = vadd.f32 %v1484, %v1731
    %v1733 = vpop.f32.mrf.mxu0
    %v1734 = vadd.f32 %v1480, %v1733
    %v1735 = vpop.f32.mrf.mxu0
    %v1736 = vadd.f32 %v1484, %v1735
    %1737 = vmatprep.mubr.bf16.mxu0 0
    %1738 = vmatmul.mubr.bf16.gmra.mxu0 %v1567
    %v1739 = vpop.f32.mrf.mxu0
    %v1740 = vadd.f32 %v1480, %v1739
    %v1741 = vpop.f32.mrf.mxu0
    %v1742 = vadd.f32 %v1484, %v1741
    %v1743 = vpop.f32.mrf.mxu0
    %v1744 = vadd.f32 %v1480, %v1743
    %v1745 = vpop.f32.mrf.mxu0
    %v1746 = vadd.f32 %v1484, %v1745
    %1747 = vmatprep.mubr.bf16.mxu0 0
    %1748 = vmatmul.mubr.bf16.gmra.mxu0 %v1570
    %v1749 = vpop.f32.mrf.mxu0
    %v1750 = vadd.f32 %v1480, %v1749
    %v1751 = vpop.f32.mrf.mxu0
    %v1752 = vadd.f32 %v1484, %v1751
    %v1753 = vpop.f32.mrf.mxu0
    %v1754 = vadd.f32 %v1480, %v1753
    %v1755 = vpop.f32.mrf.mxu0
    %v1756 = vadd.f32 %v1484, %v1755
    %1757 = vmatprep.mubr.bf16.mxu0 0
    %1758 = vmatmul.mubr.bf16.gmra.mxu0 %v1573
    %v1759 = vpop.f32.mrf.mxu0
    %v1760 = vadd.f32 %v1480, %v1759
    %v1761 = vpop.f32.mrf.mxu0
    %v1762 = vadd.f32 %v1484, %v1761
    %v1763 = vpop.f32.mrf.mxu0
    %v1764 = vadd.f32 %v1480, %v1763
    %v1765 = vpop.f32.mrf.mxu0
    %v1766 = vadd.f32 %v1484, %v1765
    %1767 = vdwg.mxu0
    %v1768 = vmax.f32 %v1610, 0.0
    %v1769 = vmax.f32 %v1614, 0.0
    %v1770 = vmax.f32 %v1620, 0.0
    %v1771 = vmax.f32 %v1624, 0.0
    %v1772 = vmax.f32 %v1630, 0.0
    %v1773 = vmax.f32 %v1634, 0.0
    %v1774 = vmax.f32 %v1640, 0.0
    %v1775 = vmax.f32 %v1644, 0.0
    %v1776 = vmax.f32 %v1650, 0.0
    %v1777 = vmax.f32 %v1654, 0.0
    %v1778 = vmax.f32 %v1660, 0.0
    %v1779 = vmax.f32 %v1664, 0.0
    %v1780 = vmax.f32 %v1670, 0.0
    %v1781 = vmax.f32 %v1674, 0.0
    %v1782 = vmax.f32 %v1680, 0.0
    %v1783 = vmax.f32 %v1684, 0.0
    %v1784 = vmax.f32 %v1690, 0.0
    %v1785 = vmax.f32 %v1694, 0.0
    %v1786 = vmax.f32 %v1700, 0.0
    %v1787 = vmax.f32 %v1704, 0.0
    %v1788 = vmax.f32 %v1710, 0.0
    %v1789 = vmax.f32 %v1714, 0.0
    %v1790 = vmax.f32 %v1720, 0.0
    %v1791 = vmax.f32 %v1724, 0.0
    %v1792 = vmax.f32 %v1730, 0.0
    %v1793 = vmax.f32 %v1734, 0.0
    %v1794 = vmax.f32 %v1740, 0.0
    %v1795 = vmax.f32 %v1744, 0.0
    %v1796 = vmax.f32 %v1750, 0.0
    %v1797 = vmax.f32 %v1754, 0.0
    %v1798 = vmax.f32 %v1760, 0.0
    %v1799 = vmax.f32 %v1764, 0.0
    %v1800 = vpack.c.bf16 %v1769, %v1768
    %v1801 = vpack.c.bf16 %v1771, %v1770
    %v1802 = vpack.c.bf16 %v1773, %v1772
    %v1803 = vpack.c.bf16 %v1775, %v1774
    %v1804 = vpack.c.bf16 %v1777, %v1776
    %v1805 = vpack.c.bf16 %v1779, %v1778
    %v1806 = vpack.c.bf16 %v1781, %v1780
    %v1807 = vpack.c.bf16 %v1783, %v1782
    %v1808 = vpack.c.bf16 %v1785, %v1784
    %v1809 = vpack.c.bf16 %v1787, %v1786
    %v1810 = vpack.c.bf16 %v1789, %v1788
    %v1811 = vpack.c.bf16 %v1791, %v1790
    %v1812 = vpack.c.bf16 %v1793, %v1792
    %v1813 = vpack.c.bf16 %v1795, %v1794
    %v1814 = vpack.c.bf16 %v1797, %v1796
    %v1815 = vpack.c.bf16 %v1799, %v1798
    %v1816 = vmax.f32 %v1612, 0.0
    %v1817 = vmax.f32 %v1616, 0.0
    %v1818 = vmax.f32 %v1622, 0.0
    %v1819 = vmax.f32 %v1626, 0.0
    %v1820 = vmax.f32 %v1632, 0.0
    %v1821 = vmax.f32 %v1636, 0.0
    %v1822 = vmax.f32 %v1642, 0.0
    %v1823 = vmax.f32 %v1646, 0.0
    %v1824 = vmax.f32 %v1652, 0.0
    %v1825 = vmax.f32 %v1656, 0.0
    %v1826 = vmax.f32 %v1662, 0.0
    %v1827 = vmax.f32 %v1666, 0.0
    %v1828 = vmax.f32 %v1672, 0.0
    %v1829 = vmax.f32 %v1676, 0.0
    %v1830 = vmax.f32 %v1682, 0.0
    %v1831 = vmax.f32 %v1686, 0.0
    %v1832 = vmax.f32 %v1692, 0.0
    %v1833 = vmax.f32 %v1696, 0.0
    %v1834 = vmax.f32 %v1702, 0.0
    %v1835 = vmax.f32 %v1706, 0.0
    %v1836 = vmax.f32 %v1712, 0.0
    %v1837 = vmax.f32 %v1716, 0.0
    %v1838 = vmax.f32 %v1722, 0.0
    %v1839 = vmax.f32 %v1726, 0.0
    %v1840 = vmax.f32 %v1732, 0.0
    %v1841 = vmax.f32 %v1736, 0.0
    %v1842 = vmax.f32 %v1742, 0.0
    %v1843 = vmax.f32 %v1746, 0.0
    %v1844 = vmax.f32 %v1752, 0.0
    %v1845 = vmax.f32 %v1756, 0.0
    %v1846 = vmax.f32 %v1762, 0.0
    %v1847 = vmax.f32 %v1766, 0.0
    %v1848 = vpack.c.bf16 %v1817, %v1816
    %v1849 = vpack.c.bf16 %v1819, %v1818
    %v1850 = vpack.c.bf16 %v1821, %v1820
    %v1851 = vpack.c.bf16 %v1823, %v1822
    %v1852 = vpack.c.bf16 %v1825, %v1824
    %v1853 = vpack.c.bf16 %v1827, %v1826
    %v1854 = vpack.c.bf16 %v1829, %v1828
    %v1855 = vpack.c.bf16 %v1831, %v1830
    %v1856 = vpack.c.bf16 %v1833, %v1832
    %v1857 = vpack.c.bf16 %v1835, %v1834
    %v1858 = vpack.c.bf16 %v1837, %v1836
    %v1859 = vpack.c.bf16 %v1839, %v1838
    %v1860 = vpack.c.bf16 %v1841, %v1840
    %v1861 = vpack.c.bf16 %v1843, %v1842
    %v1862 = vpack.c.bf16 %v1845, %v1844
    %v1863 = vpack.c.bf16 %v1847, %v1846
    %v1864 = vld [vmem:[%s8] sm:$0xf]
    %v1865 = vld [vmem:[%s8 + $0x4] sm:$0xf]
    %v1866 = vld [vmem:[%s8 + $0x8] sm:$0xf]
    %v1867 = vld [vmem:[%s8 + $0xc] sm:$0xf]
    %v1868 = vld [vmem:[%s8 + $0x10] sm:$0xf]
    %v1869 = vld [vmem:[%s8 + $0x14] sm:$0xf]
    %v1870 = vld [vmem:[%s8 + $0x18] sm:$0xf]
    %v1871 = vld [vmem:[%s8 + $0x1c] sm:$0xf]
    %v1872 = vld [vmem:[%s8 + $0x20] sm:$0xf]
    %v1873 = vld [vmem:[%s8 + $0x24] sm:$0xf]
    %v1874 = vld [vmem:[%s8 + $0x28] sm:$0xf]
    %v1875 = vld [vmem:[%s8 + $0x2c] sm:$0xf]
    %v1876 = vld [vmem:[%s8 + $0x30] sm:$0xf]
    %v1877 = vld [vmem:[%s8 + $0x34] sm:$0xf]
    %v1878 = vld [vmem:[%s8 + $0x38] sm:$0xf]
    %v1879 = vld [vmem:[%s8 + $0x3c] sm:$0xf]
    %v1896 = vunpack.c.l.b16 %v1864
    %v1897 = vunpack.c.l.b16 %v1865
    %v1898 = vunpack.c.l.b16 %v1866
    %v1899 = vunpack.c.l.b16 %v1867
    %v1900 = vunpack.c.l.b16 %v1868
    %v1901 = vunpack.c.l.b16 %v1869
    %v1902 = vunpack.c.l.b16 %v1870
    %v1903 = vunpack.c.l.b16 %v1871
    %v1904 = vunpack.c.l.b16 %v1872
    %v1905 = vunpack.c.l.b16 %v1873
    %v1906 = vunpack.c.l.b16 %v1874
    %v1907 = vunpack.c.l.b16 %v1875
    %v1908 = vunpack.c.l.b16 %v1876
    %v1909 = vunpack.c.l.b16 %v1877
    %v1910 = vunpack.c.l.b16 %v1878
    %v1911 = vunpack.c.l.b16 %v1879
    %v1912 = vpack.c.b16 %v1897, %v1896
    %v1913 = vpack.c.b16 %v1899, %v1898
    %v1914 = vpack.c.b16 %v1901, %v1900
    %v1915 = vpack.c.b16 %v1903, %v1902
    %v1916 = vpack.c.b16 %v1905, %v1904
    %v1917 = vpack.c.b16 %v1907, %v1906
    %v1918 = vpack.c.b16 %v1909, %v1908
    %v1919 = vpack.c.b16 %v1911, %v1910
    %1928 = vmatprep.subr.bf16.mxu0 0
    %1929 = vmatpush1.bf16.msra.mxu0 %v1919
    %1930 = vmatprep.subr.bf16.mxu0 0
    %1931 = vmatpush1.bf16.msra.mxu0 %v1918
    %1932 = vmatprep.subr.bf16.mxu0 0
    %1933 = vmatpush1.bf16.msra.mxu0 %v1917
    %1934 = vmatprep.subr.bf16.mxu0 0
    %1935 = vmatpush1.bf16.msra.mxu0 %v1916
    %1936 = vmatprep.subr.bf16.mxu0 0
    %1937 = vmatpush1.bf16.msra.mxu0 %v1915
    %1938 = vmatprep.subr.bf16.mxu0 0
    %1939 = vmatpush1.bf16.msra.mxu0 %v1914
    %1940 = vmatprep.subr.bf16.mxu0 0
    %1941 = vmatpush1.bf16.msra.mxu0 %v1913
    %1942 = vmatprep.subr.bf16.mxu0 0
    %1943 = vmatpush1.bf16.msra.mxu0 %v1912
    %1944 = vmatprep.subr.bf16.mxu0 0
    %1945 = vmatpush2.bf16.msra.mxu0 0
    %1946 = vmatprep.subr.bf16.mxu0 0
    %1947 = vmatpush2.bf16.msra.mxu0 0
    %1948 = vmatprep.subr.bf16.mxu0 0
    %1949 = vmatpush2.bf16.msra.mxu0 0
    %1950 = vmatprep.subr.bf16.mxu0 0
    %1951 = vmatpush2.bf16.msra.mxu0 0
    %1952 = vmatprep.subr.bf16.mxu0 0
    %1953 = vmatpush2.bf16.msra.mxu0 0
    %1954 = vmatprep.subr.bf16.mxu0 0
    %1955 = vmatpush2.bf16.msra.mxu0 0
    %1956 = vmatprep.subr.bf16.mxu0 0
    %1957 = vmatpush2.bf16.msra.mxu0 0
    %1958 = vmatprep.subr.bf16.mxu0 0
    %1959 = vmatpush2.bf16.msra.mxu0 0
    %1960 = vmatprep.mubr.bf16.mxu0 0
    %1961 = vmatmul.mubr.bf16.gmra.mxu0 %v1800
    %v1962 = vpop.f32.mrf.mxu0
    %v1963 = vadd.f32 0.0, %v1962
    %v1964 = vpop.f32.mrf.mxu0
    %v1965 = vpop.f32.mrf.mxu0
    %v1966 = vadd.f32 0.0, %v1965
    %v1967 = vpop.f32.mrf.mxu0
    %1968 = vmatprep.mubr.bf16.mxu0 0
    %1969 = vmatmul.mubr.bf16.gmra.mxu0 %v1801
    %v1970 = vpop.f32.mrf.mxu0
    %v1971 = vadd.f32 0.0, %v1970
    %v1972 = vpop.f32.mrf.mxu0
    %v1973 = vpop.f32.mrf.mxu0
    %v1974 = vadd.f32 0.0, %v1973
    %v1975 = vpop.f32.mrf.mxu0
    %1976 = vmatprep.mubr.bf16.mxu0 0
    %1977 = vmatmul.mubr.bf16.gmra.mxu0 %v1802
    %v1978 = vpop.f32.mrf.mxu0
    %v1979 = vadd.f32 0.0, %v1978
    %v1980 = vpop.f32.mrf.mxu0
    %v1981 = vpop.f32.mrf.mxu0
    %v1982 = vadd.f32 0.0, %v1981
    %v1983 = vpop.f32.mrf.mxu0
    %1984 = vmatprep.mubr.bf16.mxu0 0
    %1985 = vmatmul.mubr.bf16.gmra.mxu0 %v1803
    %v1986 = vpop.f32.mrf.mxu0
    %v1987 = vadd.f32 0.0, %v1986
    %v1988 = vpop.f32.mrf.mxu0
    %v1989 = vpop.f32.mrf.mxu0
    %v1990 = vadd.f32 0.0, %v1989
    %v1991 = vpop.f32.mrf.mxu0
    %1992 = vmatprep.mubr.bf16.mxu0 0
    %1993 = vmatmul.mubr.bf16.gmra.mxu0 %v1804
    %v1994 = vpop.f32.mrf.mxu0
    %v1995 = vadd.f32 0.0, %v1994
    %v1996 = vpop.f32.mrf.mxu0
    %v1997 = vpop.f32.mrf.mxu0
    %v1998 = vadd.f32 0.0, %v1997
    %v1999 = vpop.f32.mrf.mxu0
    %2000 = vmatprep.mubr.bf16.mxu0 0
    %2001 = vmatmul.mubr.bf16.gmra.mxu0 %v1805
    %v2002 = vpop.f32.mrf.mxu0
    %v2003 = vadd.f32 0.0, %v2002
    %v2004 = vpop.f32.mrf.mxu0
    %v2005 = vpop.f32.mrf.mxu0
    %v2006 = vadd.f32 0.0, %v2005
    %v2007 = vpop.f32.mrf.mxu0
    %2008 = vmatprep.mubr.bf16.mxu0 0
    %2009 = vmatmul.mubr.bf16.gmra.mxu0 %v1806
    %v2010 = vpop.f32.mrf.mxu0
    %v2011 = vadd.f32 0.0, %v2010
    %v2012 = vpop.f32.mrf.mxu0
    %v2013 = vpop.f32.mrf.mxu0
    %v2014 = vadd.f32 0.0, %v2013
    %v2015 = vpop.f32.mrf.mxu0
    %2016 = vmatprep.mubr.bf16.mxu0 0
    %2017 = vmatmul.mubr.bf16.gmra.mxu0 %v1807
    %v2018 = vpop.f32.mrf.mxu0
    %v2019 = vadd.f32 0.0, %v2018
    %v2020 = vpop.f32.mrf.mxu0
    %v2021 = vpop.f32.mrf.mxu0
    %v2022 = vadd.f32 0.0, %v2021
    %v2023 = vpop.f32.mrf.mxu0
    %2024 = vmatprep.mubr.bf16.mxu0 0
    %2025 = vmatmul.mubr.bf16.gmra.mxu0 %v1808
    %v2026 = vpop.f32.mrf.mxu0
    %v2027 = vadd.f32 0.0, %v2026
    %v2028 = vpop.f32.mrf.mxu0
    %v2029 = vpop.f32.mrf.mxu0
    %v2030 = vadd.f32 0.0, %v2029
    %v2031 = vpop.f32.mrf.mxu0
    %2032 = vmatprep.mubr.bf16.mxu0 0
    %2033 = vmatmul.mubr.bf16.gmra.mxu0 %v1809
    %v2034 = vpop.f32.mrf.mxu0
    %v2035 = vadd.f32 0.0, %v2034
    %v2036 = vpop.f32.mrf.mxu0
    %v2037 = vpop.f32.mrf.mxu0
    %v2038 = vadd.f32 0.0, %v2037
    %v2039 = vpop.f32.mrf.mxu0
    %2040 = vmatprep.mubr.bf16.mxu0 0
    %2041 = vmatmul.mubr.bf16.gmra.mxu0 %v1810
    %v2042 = vpop.f32.mrf.mxu0
    %v2043 = vadd.f32 0.0, %v2042
    %v2044 = vpop.f32.mrf.mxu0
    %v2045 = vpop.f32.mrf.mxu0
    %v2046 = vadd.f32 0.0, %v2045
    %v2047 = vpop.f32.mrf.mxu0
    %2048 = vmatprep.mubr.bf16.mxu0 0
    %2049 = vmatmul.mubr.bf16.gmra.mxu0 %v1811
    %v2050 = vpop.f32.mrf.mxu0
    %v2051 = vadd.f32 0.0, %v2050
    %v2052 = vpop.f32.mrf.mxu0
    %v2053 = vpop.f32.mrf.mxu0
    %v2054 = vadd.f32 0.0, %v2053
    %v2055 = vpop.f32.mrf.mxu0
    %2056 = vmatprep.mubr.bf16.mxu0 0
    %2057 = vmatmul.mubr.bf16.gmra.mxu0 %v1812
    %v2058 = vpop.f32.mrf.mxu0
    %v2059 = vadd.f32 0.0, %v2058
    %v2060 = vpop.f32.mrf.mxu0
    %v2061 = vpop.f32.mrf.mxu0
    %v2062 = vadd.f32 0.0, %v2061
    %v2063 = vpop.f32.mrf.mxu0
    %2064 = vmatprep.mubr.bf16.mxu0 0
    %2065 = vmatmul.mubr.bf16.gmra.mxu0 %v1813
    %v2066 = vpop.f32.mrf.mxu0
    %v2067 = vadd.f32 0.0, %v2066
    %v2068 = vpop.f32.mrf.mxu0
    %v2069 = vpop.f32.mrf.mxu0
    %v2070 = vadd.f32 0.0, %v2069
    %v2071 = vpop.f32.mrf.mxu0
    %2072 = vmatprep.mubr.bf16.mxu0 0
    %2073 = vmatmul.mubr.bf16.gmra.mxu0 %v1814
    %v2074 = vpop.f32.mrf.mxu0
    %v2075 = vadd.f32 0.0, %v2074
    %v2076 = vpop.f32.mrf.mxu0
    %v2077 = vpop.f32.mrf.mxu0
    %v2078 = vadd.f32 0.0, %v2077
    %v2079 = vpop.f32.mrf.mxu0
    %2080 = vmatprep.mubr.bf16.mxu0 0
    %2081 = vmatmul.mubr.bf16.gmra.mxu0 %v1815
    %v2082 = vpop.f32.mrf.mxu0
    %v2083 = vadd.f32 0.0, %v2082
    %v2084 = vpop.f32.mrf.mxu0
    %v2085 = vpop.f32.mrf.mxu0
    %v2086 = vadd.f32 0.0, %v2085
    %v2087 = vpop.f32.mrf.mxu0
    %2088 = vdwg.mxu0
    %v2089 = vpack.c.bf16 %v1966, %v1963
    %v2090 = vpack.c.bf16 %v1974, %v1971
    %v2091 = vpack.c.bf16 %v1982, %v1979
    %v2092 = vpack.c.bf16 %v1990, %v1987
    %v2093 = vpack.c.bf16 %v1998, %v1995
    %v2094 = vpack.c.bf16 %v2006, %v2003
    %v2095 = vpack.c.bf16 %v2014, %v2011
    %v2096 = vpack.c.bf16 %v2022, %v2019
    %v2097 = vpack.c.bf16 %v2030, %v2027
    %v2098 = vpack.c.bf16 %v2038, %v2035
    %v2099 = vpack.c.bf16 %v2046, %v2043
    %v2100 = vpack.c.bf16 %v2054, %v2051
    %v2101 = vpack.c.bf16 %v2062, %v2059
    %v2102 = vpack.c.bf16 %v2070, %v2067
    %v2103 = vpack.c.bf16 %v2078, %v2075
    %v2104 = vpack.c.bf16 %v2086, %v2083
    %v2105 = vld [vmem:[%s9] sm:$0x1]
    %v2107 = vlaneseq
    %v2108 = vshrl.u32 %v2107, 7
    %v2109 = vsub.s32 0, %v2108
    %v2110 = vrot.slane %v2105, %v2109
    %2112 = vmatprep.subr.bf16.mxu0 0
    %2113 = vmatpush1.bf16.msra.mxu0 %v2096
    %2114 = vmatprep.subr.bf16.mxu0 0
    %2115 = vmatpush1.bf16.msra.mxu0 %v2095
    %2116 = vmatprep.subr.bf16.mxu0 0
    %2117 = vmatpush1.bf16.msra.mxu0 %v2094
    %2118 = vmatprep.subr.bf16.mxu0 0
    %2119 = vmatpush1.bf16.msra.mxu0 %v2093
    %2120 = vmatprep.subr.bf16.mxu0 0
    %2121 = vmatpush1.bf16.msra.mxu0 %v2092
    %2122 = vmatprep.subr.bf16.mxu0 0
    %2123 = vmatpush1.bf16.msra.mxu0 %v2091
    %2124 = vmatprep.subr.bf16.mxu0 0
    %2125 = vmatpush1.bf16.msra.mxu0 %v2090
    %2126 = vmatprep.subr.bf16.mxu0 0
    %2127 = vmatpush1.bf16.msra.mxu0 %v2089
    %2128 = vmatprep.subr.bf16.mxu0 0
    %2129 = vmatpush2.bf16.msra.mxu0 %v2104
    %2130 = vmatprep.subr.bf16.mxu0 0
    %2131 = vmatpush2.bf16.msra.mxu0 %v2103
    %2132 = vmatprep.subr.bf16.mxu0 0
    %2133 = vmatpush2.bf16.msra.mxu0 %v2102
    %2134 = vmatprep.subr.bf16.mxu0 0
    %2135 = vmatpush2.bf16.msra.mxu0 %v2101
    %2136 = vmatprep.subr.bf16.mxu0 0
    %2137 = vmatpush2.bf16.msra.mxu0 %v2100
    %2138 = vmatprep.subr.bf16.mxu0 0
    %2139 = vmatpush2.bf16.msra.mxu0 %v2099
    %2140 = vmatprep.subr.bf16.mxu0 0
    %2141 = vmatpush2.bf16.msra.mxu0 %v2098
    %2142 = vmatprep.subr.bf16.mxu0 0
    %2143 = vmatpush2.bf16.msra.mxu0 %v2097
    %2144 = vmatprep.mubr.bf16.mxu0 %v200
    %2145 = vmatmul.mubr.bf16.gmra.mxu0 %v199
    %v2146 = vpop.f32.mrf.mxu0
    %v2147 = vadd.f32 %v2110, %v2146
    %v2148 = vpop.f32.mrf.mxu0
    %v2149 = vpop.f32.mrf.mxu0
    %v2150 = vadd.f32 %v2110, %v2149
    %v2151 = vpop.f32.mrf.mxu0
    %2152 = vmatprep.mubr.bf16.mxu0 %v202
    %2153 = vmatmul.mubr.bf16.gmra.mxu0 %v201
    %v2154 = vpop.f32.mrf.mxu0
    %v2155 = vadd.f32 %v2110, %v2154
    %v2156 = vpop.f32.mrf.mxu0
    %v2157 = vpop.f32.mrf.mxu0
    %v2158 = vadd.f32 %v2110, %v2157
    %v2159 = vpop.f32.mrf.mxu0
    %2160 = vmatprep.mubr.bf16.mxu0 %v204
    %2161 = vmatmul.mubr.bf16.gmra.mxu0 %v203
    %v2162 = vpop.f32.mrf.mxu0
    %v2163 = vadd.f32 %v2110, %v2162
    %v2164 = vpop.f32.mrf.mxu0
    %v2165 = vpop.f32.mrf.mxu0
    %v2166 = vadd.f32 %v2110, %v2165
    %v2167 = vpop.f32.mrf.mxu0
    %2168 = vmatprep.mubr.bf16.mxu0 %v206
    %2169 = vmatmul.mubr.bf16.gmra.mxu0 %v205
    %v2170 = vpop.f32.mrf.mxu0
    %v2171 = vadd.f32 %v2110, %v2170
    %v2172 = vpop.f32.mrf.mxu0
    %v2173 = vpop.f32.mrf.mxu0
    %v2174 = vadd.f32 %v2110, %v2173
    %v2175 = vpop.f32.mrf.mxu0
    %2176 = vmatprep.mubr.bf16.mxu0 %v208
    %2177 = vmatmul.mubr.bf16.gmra.mxu0 %v207
    %v2178 = vpop.f32.mrf.mxu0
    %v2179 = vadd.f32 %v2110, %v2178
    %v2180 = vpop.f32.mrf.mxu0
    %v2181 = vpop.f32.mrf.mxu0
    %v2182 = vadd.f32 %v2110, %v2181
    %v2183 = vpop.f32.mrf.mxu0
    %2184 = vmatprep.mubr.bf16.mxu0 %v210
    %2185 = vmatmul.mubr.bf16.gmra.mxu0 %v209
    %v2186 = vpop.f32.mrf.mxu0
    %v2187 = vadd.f32 %v2110, %v2186
    %v2188 = vpop.f32.mrf.mxu0
    %v2189 = vpop.f32.mrf.mxu0
    %v2190 = vadd.f32 %v2110, %v2189
    %v2191 = vpop.f32.mrf.mxu0
    %2192 = vmatprep.mubr.bf16.mxu0 %v212
    %2193 = vmatmul.mubr.bf16.gmra.mxu0 %v211
    %v2194 = vpop.f32.mrf.mxu0
    %v2195 = vadd.f32 %v2110, %v2194
    %v2196 = vpop.f32.mrf.mxu0
    %v2197 = vpop.f32.mrf.mxu0
    %v2198 = vadd.f32 %v2110, %v2197
    %v2199 = vpop.f32.mrf.mxu0
    %2200 = vmatprep.mubr.bf16.mxu0 %v214
    %2201 = vmatmul.mubr.bf16.gmra.mxu0 %v213
    %v2202 = vpop.f32.mrf.mxu0
    %v2203 = vadd.f32 %v2110, %v2202
    %v2204 = vpop.f32.mrf.mxu0
    %v2205 = vpop.f32.mrf.mxu0
    %v2206 = vadd.f32 %v2110, %v2205
    %v2207 = vpop.f32.mrf.mxu0
    %2208 = vmatprep.mubr.bf16.mxu0 %v216
    %2209 = vmatmul.mubr.bf16.gmra.mxu0 %v215
    %v2210 = vpop.f32.mrf.mxu0
    %v2211 = vadd.f32 %v2110, %v2210
    %v2212 = vpop.f32.mrf.mxu0
    %v2213 = vpop.f32.mrf.mxu0
    %v2214 = vadd.f32 %v2110, %v2213
    %v2215 = vpop.f32.mrf.mxu0
    %2216 = vmatprep.mubr.bf16.mxu0 %v218
    %2217 = vmatmul.mubr.bf16.gmra.mxu0 %v217
    %v2218 = vpop.f32.mrf.mxu0
    %v2219 = vadd.f32 %v2110, %v2218
    %v2220 = vpop.f32.mrf.mxu0
    %v2221 = vpop.f32.mrf.mxu0
    %v2222 = vadd.f32 %v2110, %v2221
    %v2223 = vpop.f32.mrf.mxu0
    %2224 = vmatprep.mubr.bf16.mxu0 %v220
    %2225 = vmatmul.mubr.bf16.gmra.mxu0 %v219
    %v2226 = vpop.f32.mrf.mxu0
    %v2227 = vadd.f32 %v2110, %v2226
    %v2228 = vpop.f32.mrf.mxu0
    %v2229 = vpop.f32.mrf.mxu0
    %v2230 = vadd.f32 %v2110, %v2229
    %v2231 = vpop.f32.mrf.mxu0
    %2232 = vmatprep.mubr.bf16.mxu0 %v222
    %2233 = vmatmul.mubr.bf16.gmra.mxu0 %v221
    %v2234 = vpop.f32.mrf.mxu0
    %v2235 = vadd.f32 %v2110, %v2234
    %v2236 = vpop.f32.mrf.mxu0
    %v2237 = vpop.f32.mrf.mxu0
    %v2238 = vadd.f32 %v2110, %v2237
    %v2239 = vpop.f32.mrf.mxu0
    %2240 = vmatprep.mubr.bf16.mxu0 %v224
    %2241 = vmatmul.mubr.bf16.gmra.mxu0 %v223
    %v2242 = vpop.f32.mrf.mxu0
    %v2243 = vadd.f32 %v2110, %v2242
    %v2244 = vpop.f32.mrf.mxu0
    %v2245 = vpop.f32.mrf.mxu0
    %v2246 = vadd.f32 %v2110, %v2245
    %v2247 = vpop.f32.mrf.mxu0
    %2248 = vmatprep.mubr.bf16.mxu0 %v226
    %2249 = vmatmul.mubr.bf16.gmra.mxu0 %v225
    %v2250 = vpop.f32.mrf.mxu0
    %v2251 = vadd.f32 %v2110, %v2250
    %v2252 = vpop.f32.mrf.mxu0
    %v2253 = vpop.f32.mrf.mxu0
    %v2254 = vadd.f32 %v2110, %v2253
    %v2255 = vpop.f32.mrf.mxu0
    %2256 = vmatprep.mubr.bf16.mxu0 %v228
    %2257 = vmatmul.mubr.bf16.gmra.mxu0 %v227
    %v2258 = vpop.f32.mrf.mxu0
    %v2259 = vadd.f32 %v2110, %v2258
    %v2260 = vpop.f32.mrf.mxu0
    %v2261 = vpop.f32.mrf.mxu0
    %v2262 = vadd.f32 %v2110, %v2261
    %v2263 = vpop.f32.mrf.mxu0
    %2264 = vmatprep.mubr.bf16.mxu0 %v230
    %2265 = vmatmul.mubr.bf16.gmra.mxu0 %v229
    %v2266 = vpop.f32.mrf.mxu0
    %v2267 = vadd.f32 %v2110, %v2266
    %v2268 = vpop.f32.mrf.mxu0
    %v2269 = vpop.f32.mrf.mxu0
    %v2270 = vadd.f32 %v2110, %v2269
    %v2271 = vpop.f32.mrf.mxu0
    %2272 = vdwg.mxu0
    %2273 = vst.msk [vmem:[%s10] sm:$0xff] %vm575, %v2147
    %2274 = vst.msk [vmem:[%s10 + $0x8] sm:$0xff] %vm575, %v2150
    %2275 = vst.msk [vmem:[%s10 + $0x10] sm:$0xff] %vm575, %v2155
    %2276 = vst.msk [vmem:[%s10 + $0x18] sm:$0xff] %vm575, %v2158
    %2277 = vst.msk [vmem:[%s10 + $0x20] sm:$0xff] %vm575, %v2163
    %2278 = vst.msk [vmem:[%s10 + $0x28] sm:$0xff] %vm575, %v2166
    %2279 = vst.msk [vmem:[%s10 + $0x30] sm:$0xff] %vm575, %v2171
    %2280 = vst.msk [vmem:[%s10 + $0x38] sm:$0xff] %vm575, %v2174
    %2281 = vst.msk [vmem:[%s10 + $0x40] sm:$0xff] %vm575, %v2179
    %2282 = vst.msk [vmem:[%s10 + $0x48] sm:$0xff] %vm575, %v2182
    %2283 = vst.msk [vmem:[%s10 + $0x50] sm:$0xff] %vm575, %v2187
    %2284 = vst.msk [vmem:[%s10 + $0x58] sm:$0xff] %vm575, %v2190
    %2285 = vst.msk [vmem:[%s10 + $0x60] sm:$0xff] %vm575, %v2195
    %2286 = vst.msk [vmem:[%s10 + $0x68] sm:$0xff] %vm575, %v2198
    %2287 = vst.msk [vmem:[%s10 + $0x70] sm:$0xff] %vm575, %v2203
    %2288 = vst.msk [vmem:[%s10 + $0x78] sm:$0xff] %vm575, %v2206
    %2289 = vst.msk [vmem:[%s10 + $0x80] sm:$0xff] %vm575, %v2211
    %2290 = vst.msk [vmem:[%s10 + $0x88] sm:$0xff] %vm575, %v2214
    %2291 = vst.msk [vmem:[%s10 + $0x90] sm:$0xff] %vm575, %v2219
    %2292 = vst.msk [vmem:[%s10 + $0x98] sm:$0xff] %vm575, %v2222
    %2293 = vst.msk [vmem:[%s10 + $0xa0] sm:$0xff] %vm575, %v2227
    %2294 = vst.msk [vmem:[%s10 + $0xa8] sm:$0xff] %vm575, %v2230
    %2295 = vst.msk [vmem:[%s10 + $0xb0] sm:$0xff] %vm575, %v2235
    %2296 = vst.msk [vmem:[%s10 + $0xb8] sm:$0xff] %vm575, %v2238
    %2297 = vst.msk [vmem:[%s10 + $0xc0] sm:$0xff] %vm575, %v2243
    %2298 = vst.msk [vmem:[%s10 + $0xc8] sm:$0xff] %vm575, %v2246
    %2299 = vst.msk [vmem:[%s10 + $0xd0] sm:$0xff] %vm575, %v2251
    %2300 = vst.msk [vmem:[%s10 + $0xd8] sm:$0xff] %vm575, %v2254
    %2301 = vst.msk [vmem:[%s10 + $0xe0] sm:$0xff] %vm575, %v2259
    %2302 = vst.msk [vmem:[%s10 + $0xe8] sm:$0xff] %vm575, %v2262
    %2303 = vst.msk [vmem:[%s10 + $0xf0] sm:$0xff] %vm575, %v2267
    %2304 = vst.msk [vmem:[%s10 + $0xf8] sm:$0xff] %vm575, %v2270
    %v2306 = vsel %vm575, %v1848, 0
    %v2309 = vsel %vm575, %v1849, 0
    %v2312 = vsel %vm575, %v1850, 0
    %v2315 = vsel %vm575, %v1851, 0
    %v2318 = vsel %vm575, %v1852, 0
    %v2321 = vsel %vm575, %v1853, 0
    %v2324 = vsel %vm575, %v1854, 0
    %v2327 = vsel %vm575, %v1855, 0
    %v2330 = vsel %vm575, %v1856, 0
    %v2333 = vsel %vm575, %v1857, 0
    %v2336 = vsel %vm575, %v1858, 0
    %v2339 = vsel %vm575, %v1859, 0
    %v2342 = vsel %vm575, %v1860, 0
    %v2345 = vsel %vm575, %v1861, 0
    %v2348 = vsel %vm575, %v1862, 0
    %v2351 = vsel %vm575, %v1863, 0
    %2353 = vmatprep.subr.bf16.mxu0 0
    %2354 = vmatpush1.bf16.xpose.msra.mxu0 %v2327
    %2355 = vmatprep.subr.bf16.mxu0 0
    %2356 = vmatpush1.bf16.xpose.msra.mxu0 %v2324
    %2357 = vmatprep.subr.bf16.mxu0 0
    %2358 = vmatpush1.bf16.xpose.msra.mxu0 %v2321
    %2359 = vmatprep.subr.bf16.mxu0 0
    %2360 = vmatpush1.bf16.xpose.msra.mxu0 %v2318
    %2361 = vmatprep.subr.bf16.mxu0 0
    %2362 = vmatpush1.bf16.xpose.msra.mxu0 %v2315
    %2363 = vmatprep.subr.bf16.mxu0 0
    %2364 = vmatpush1.bf16.xpose.msra.mxu0 %v2312
    %2365 = vmatprep.subr.bf16.mxu0 0
    %2366 = vmatpush1.bf16.xpose.msra.mxu0 %v2309
    %2367 = vmatprep.subr.bf16.mxu0 0
    %2368 = vmatpush1.bf16.xpose.msra.mxu0 %v2306
    %2369 = vmatprep.subr.bf16.mxu0 0
    %2370 = vmatpush2.bf16.xpose.msra.mxu0 %v2351
    %2371 = vmatprep.subr.bf16.mxu0 0
    %2372 = vmatpush2.bf16.xpose.msra.mxu0 %v2348
    %2373 = vmatprep.subr.bf16.mxu0 0
    %2374 = vmatpush2.bf16.xpose.msra.mxu0 %v2345
    %2375 = vmatprep.subr.bf16.mxu0 0
    %2376 = vmatpush2.bf16.xpose.msra.mxu0 %v2342
    %2377 = vmatprep.subr.bf16.mxu0 0
    %2378 = vmatpush2.bf16.xpose.msra.mxu0 %v2339
    %2379 = vmatprep.subr.bf16.mxu0 0
    %2380 = vmatpush2.bf16.xpose.msra.mxu0 %v2336
    %2381 = vmatprep.subr.bf16.mxu0 0
    %2382 = vmatpush2.bf16.xpose.msra.mxu0 %v2333
    %2383 = vmatprep.subr.bf16.mxu0 0
    %2384 = vmatpush2.bf16.xpose.msra.mxu0 %v2330
    %2385 = vmatprep.mubr.bf16.mxu0 0
    %2386 = vmatmul.mubr.bf16.gmra.mxu0 %v2306
    %v2387 = vpop.f32.mrf.mxu0
    %v2388 = vadd.f32 0.0, %v2387
    %v2389 = vpop.f32.mrf.mxu0
    %v2390 = vadd.f32 0.0, %v2389
    %v2391 = vpop.f32.mrf.mxu0
    %v2392 = vadd.f32 0.0, %v2391
    %v2393 = vpop.f32.mrf.mxu0
    %v2394 = vadd.f32 0.0, %v2393
    %2395 = vmatprep.mubr.bf16.mxu0 0
    %2396 = vmatmul.mubr.bf16.gmra.mxu0 %v2309
    %v2397 = vpop.f32.mrf.mxu0
    %v2398 = vadd.f32 0.0, %v2397
    %v2399 = vpop.f32.mrf.mxu0
    %v2400 = vadd.f32 0.0, %v2399
    %v2401 = vpop.f32.mrf.mxu0
    %v2402 = vadd.f32 0.0, %v2401
    %v2403 = vpop.f32.mrf.mxu0
    %v2404 = vadd.f32 0.0, %v2403
    %2405 = vmatprep.mubr.bf16.mxu0 0
    %2406 = vmatmul.mubr.bf16.gmra.mxu0 %v2312
    %v2407 = vpop.f32.mrf.mxu0
    %v2408 = vadd.f32 0.0, %v2407
    %v2409 = vpop.f32.mrf.mxu0
    %v2410 = vadd.f32 0.0, %v2409
    %v2411 = vpop.f32.mrf.mxu0
    %v2412 = vadd.f32 0.0, %v2411
    %v2413 = vpop.f32.mrf.mxu0
    %v2414 = vadd.f32 0.0, %v2413
    %2415 = vmatprep.mubr.bf16.mxu0 0
    %2416 = vmatmul.mubr.bf16.gmra.mxu0 %v2315
    %v2417 = vpop.f32.mrf.mxu0
    %v2418 = vadd.f32 0.0, %v2417
    %v2419 = vpop.f32.mrf.mxu0
    %v2420 = vadd.f32 0.0, %v2419
    %v2421 = vpop.f32.mrf.mxu0
    %v2422 = vadd.f32 0.0, %v2421
    %v2423 = vpop.f32.mrf.mxu0
    %v2424 = vadd.f32 0.0, %v2423
    %2425 = vmatprep.mubr.bf16.mxu0 0
    %2426 = vmatmul.mubr.bf16.gmra.mxu0 %v2318
    %v2427 = vpop.f32.mrf.mxu0
    %v2428 = vadd.f32 0.0, %v2427
    %v2429 = vpop.f32.mrf.mxu0
    %v2430 = vadd.f32 0.0, %v2429
    %v2431 = vpop.f32.mrf.mxu0
    %v2432 = vadd.f32 0.0, %v2431
    %v2433 = vpop.f32.mrf.mxu0
    %v2434 = vadd.f32 0.0, %v2433
    %2435 = vmatprep.mubr.bf16.mxu0 0
    %2436 = vmatmul.mubr.bf16.gmra.mxu0 %v2321
    %v2437 = vpop.f32.mrf.mxu0
    %v2438 = vadd.f32 0.0, %v2437
    %v2439 = vpop.f32.mrf.mxu0
    %v2440 = vadd.f32 0.0, %v2439
    %v2441 = vpop.f32.mrf.mxu0
    %v2442 = vadd.f32 0.0, %v2441
    %v2443 = vpop.f32.mrf.mxu0
    %v2444 = vadd.f32 0.0, %v2443
    %2445 = vmatprep.mubr.bf16.mxu0 0
    %2446 = vmatmul.mubr.bf16.gmra.mxu0 %v2324
    %v2447 = vpop.f32.mrf.mxu0
    %v2448 = vadd.f32 0.0, %v2447
    %v2449 = vpop.f32.mrf.mxu0
    %v2450 = vadd.f32 0.0, %v2449
    %v2451 = vpop.f32.mrf.mxu0
    %v2452 = vadd.f32 0.0, %v2451
    %v2453 = vpop.f32.mrf.mxu0
    %v2454 = vadd.f32 0.0, %v2453
    %2455 = vmatprep.mubr.bf16.mxu0 0
    %2456 = vmatmul.mubr.bf16.gmra.mxu0 %v2327
    %v2457 = vpop.f32.mrf.mxu0
    %v2458 = vadd.f32 0.0, %v2457
    %v2459 = vpop.f32.mrf.mxu0
    %v2460 = vadd.f32 0.0, %v2459
    %v2461 = vpop.f32.mrf.mxu0
    %v2462 = vadd.f32 0.0, %v2461
    %v2463 = vpop.f32.mrf.mxu0
    %v2464 = vadd.f32 0.0, %v2463
    %2465 = vmatprep.mubr.bf16.mxu0 0
    %2466 = vmatmul.mubr.bf16.gmra.mxu0 %v2330
    %v2467 = vpop.f32.mrf.mxu0
    %v2468 = vadd.f32 0.0, %v2467
    %v2469 = vpop.f32.mrf.mxu0
    %v2470 = vadd.f32 0.0, %v2469
    %v2471 = vpop.f32.mrf.mxu0
    %v2472 = vadd.f32 0.0, %v2471
    %v2473 = vpop.f32.mrf.mxu0
    %v2474 = vadd.f32 0.0, %v2473
    %2475 = vmatprep.mubr.bf16.mxu0 0
    %2476 = vmatmul.mubr.bf16.gmra.mxu0 %v2333
    %v2477 = vpop.f32.mrf.mxu0
    %v2478 = vadd.f32 0.0, %v2477
    %v2479 = vpop.f32.mrf.mxu0
    %v2480 = vadd.f32 0.0, %v2479
    %v2481 = vpop.f32.mrf.mxu0
    %v2482 = vadd.f32 0.0, %v2481
    %v2483 = vpop.f32.mrf.mxu0
    %v2484 = vadd.f32 0.0, %v2483
    %2485 = vmatprep.mubr.bf16.mxu0 0
    %2486 = vmatmul.mubr.bf16.gmra.mxu0 %v2336
    %v2487 = vpop.f32.mrf.mxu0
    %v2488 = vadd.f32 0.0, %v2487
    %v2489 = vpop.f32.mrf.mxu0
    %v2490 = vadd.f32 0.0, %v2489
    %v2491 = vpop.f32.mrf.mxu0
    %v2492 = vadd.f32 0.0, %v2491
    %v2493 = vpop.f32.mrf.mxu0
    %v2494 = vadd.f32 0.0, %v2493
    %2495 = vmatprep.mubr.bf16.mxu0 0
    %2496 = vmatmul.mubr.bf16.gmra.mxu0 %v2339
    %v2497 = vpop.f32.mrf.mxu0
    %v2498 = vadd.f32 0.0, %v2497
    %v2499 = vpop.f32.mrf.mxu0
    %v2500 = vadd.f32 0.0, %v2499
    %v2501 = vpop.f32.mrf.mxu0
    %v2502 = vadd.f32 0.0, %v2501
    %v2503 = vpop.f32.mrf.mxu0
    %v2504 = vadd.f32 0.0, %v2503
    %2505 = vmatprep.mubr.bf16.mxu0 0
    %2506 = vmatmul.mubr.bf16.gmra.mxu0 %v2342
    %v2507 = vpop.f32.mrf.mxu0
    %v2508 = vadd.f32 0.0, %v2507
    %v2509 = vpop.f32.mrf.mxu0
    %v2510 = vadd.f32 0.0, %v2509
    %v2511 = vpop.f32.mrf.mxu0
    %v2512 = vadd.f32 0.0, %v2511
    %v2513 = vpop.f32.mrf.mxu0
    %v2514 = vadd.f32 0.0, %v2513
    %2515 = vmatprep.mubr.bf16.mxu0 0
    %2516 = vmatmul.mubr.bf16.gmra.mxu0 %v2345
    %v2517 = vpop.f32.mrf.mxu0
    %v2518 = vadd.f32 0.0, %v2517
    %v2519 = vpop.f32.mrf.mxu0
    %v2520 = vadd.f32 0.0, %v2519
    %v2521 = vpop.f32.mrf.mxu0
    %v2522 = vadd.f32 0.0, %v2521
    %v2523 = vpop.f32.mrf.mxu0
    %v2524 = vadd.f32 0.0, %v2523
    %2525 = vmatprep.mubr.bf16.mxu0 0
    %2526 = vmatmul.mubr.bf16.gmra.mxu0 %v2348
    %v2527 = vpop.f32.mrf.mxu0
    %v2528 = vadd.f32 0.0, %v2527
    %v2529 = vpop.f32.mrf.mxu0
    %v2530 = vadd.f32 0.0, %v2529
    %v2531 = vpop.f32.mrf.mxu0
    %v2532 = vadd.f32 0.0, %v2531
    %v2533 = vpop.f32.mrf.mxu0
    %v2534 = vadd.f32 0.0, %v2533
    %2535 = vmatprep.mubr.bf16.mxu0 0
    %2536 = vmatmul.mubr.bf16.gmra.mxu0 %v2351
    %v2537 = vpop.f32.mrf.mxu0
    %v2538 = vadd.f32 0.0, %v2537
    %v2539 = vpop.f32.mrf.mxu0
    %v2540 = vadd.f32 0.0, %v2539
    %v2541 = vpop.f32.mrf.mxu0
    %v2542 = vadd.f32 0.0, %v2541
    %v2543 = vpop.f32.mrf.mxu0
    %v2544 = vadd.f32 0.0, %v2543
    %2545 = vdwg.mxu0
    %2546 = vst [vmem:[#allocation2] sm:$0xff] %v2388
    %2547 = vst [vmem:[#allocation2 + $0x8] sm:$0xff] %v2390
    %2548 = vst [vmem:[#allocation2 + $0x10] sm:$0xff] %v2392
    %2549 = vst [vmem:[#allocation2 + $0x18] sm:$0xff] %v2394
    %2550 = vst [vmem:[#allocation2 + $0x20] sm:$0xff] %v2398
    %2551 = vst [vmem:[#allocation2 + $0x28] sm:$0xff] %v2400
    %2552 = vst [vmem:[#allocation2 + $0x30] sm:$0xff] %v2402
    %2553 = vst [vmem:[#allocation2 + $0x38] sm:$0xff] %v2404
    %2554 = vst [vmem:[#allocation2 + $0x40] sm:$0xff] %v2408
    %2555 = vst [vmem:[#allocation2 + $0x48] sm:$0xff] %v2410
    %2556 = vst [vmem:[#allocation2 + $0x50] sm:$0xff] %v2412
    %2557 = vst [vmem:[#allocation2 + $0x58] sm:$0xff] %v2414
    %2558 = vst [vmem:[#allocation2 + $0x60] sm:$0xff] %v2418
    %2559 = vst [vmem:[#allocation2 + $0x68] sm:$0xff] %v2420
    %2560 = vst [vmem:[#allocation2 + $0x70] sm:$0xff] %v2422
    %2561 = vst [vmem:[#allocation2 + $0x78] sm:$0xff] %v2424
    %2562 = vst [vmem:[#allocation2 + $0x80] sm:$0xff] %v2428
    %2563 = vst [vmem:[#allocation2 + $0x88] sm:$0xff] %v2430
    %2564 = vst [vmem:[#allocation2 + $0x90] sm:$0xff] %v2432
    %2565 = vst [vmem:[#allocation2 + $0x98] sm:$0xff] %v2434
    %2566 = vst [vmem:[#allocation2 + $0xa0] sm:$0xff] %v2438
    %2567 = vst [vmem:[#allocation2 + $0xa8] sm:$0xff] %v2440
    %2568 = vst [vmem:[#allocation2 + $0xb0] sm:$0xff] %v2442
    %2569 = vst [vmem:[#allocation2 + $0xb8] sm:$0xff] %v2444
    %2570 = vst [vmem:[#allocation2 + $0xc0] sm:$0xff] %v2448
    %2571 = vst [vmem:[#allocation2 + $0xc8] sm:$0xff] %v2450
    %2572 = vst [vmem:[#allocation2 + $0xd0] sm:$0xff] %v2452
    %2573 = vst [vmem:[#allocation2 + $0xd8] sm:$0xff] %v2454
    %2574 = vst [vmem:[#allocation2 + $0xe0] sm:$0xff] %v2458
    %2575 = vst [vmem:[#allocation2 + $0xe8] sm:$0xff] %v2460
    %2576 = vst [vmem:[#allocation2 + $0xf0] sm:$0xff] %v2462
    %2577 = vst [vmem:[#allocation2 + $0xf8] sm:$0xff] %v2464
    %2578 = vst [vmem:[#allocation2 + $0x100] sm:$0xff] %v2468
    %2579 = vst [vmem:[#allocation2 + $0x108] sm:$0xff] %v2470
    %2580 = vst [vmem:[#allocation2 + $0x110] sm:$0xff] %v2472
    %2581 = vst [vmem:[#allocation2 + $0x118] sm:$0xff] %v2474
    %2582 = vst [vmem:[#allocation2 + $0x120] sm:$0xff] %v2478
    %2583 = vst [vmem:[#allocation2 + $0x128] sm:$0xff] %v2480
    %2584 = vst [vmem:[#allocation2 + $0x130] sm:$0xff] %v2482
    %2585 = vst [vmem:[#allocation2 + $0x138] sm:$0xff] %v2484
    %2586 = vst [vmem:[#allocation2 + $0x140] sm:$0xff] %v2488
    %2587 = vst [vmem:[#allocation2 + $0x148] sm:$0xff] %v2490
    %2588 = vst [vmem:[#allocation2 + $0x150] sm:$0xff] %v2492
    %2589 = vst [vmem:[#allocation2 + $0x158] sm:$0xff] %v2494
    %2590 = vst [vmem:[#allocation2 + $0x160] sm:$0xff] %v2498
    %2591 = vst [vmem:[#allocation2 + $0x168] sm:$0xff] %v2500
    %2592 = vst [vmem:[#allocation2 + $0x170] sm:$0xff] %v2502
    %2593 = vst [vmem:[#allocation2 + $0x178] sm:$0xff] %v2504
    %2594 = vst [vmem:[#allocation2 + $0x180] sm:$0xff] %v2508
    %2595 = vst [vmem:[#allocation2 + $0x188] sm:$0xff] %v2510
    %2596 = vst [vmem:[#allocation2 + $0x190] sm:$0xff] %v2512
    %2597 = vst [vmem:[#allocation2 + $0x198] sm:$0xff] %v2514
    %2598 = vst [vmem:[#allocation2 + $0x1a0] sm:$0xff] %v2518
    %2599 = vst [vmem:[#allocation2 + $0x1a8] sm:$0xff] %v2520
    %2600 = vst [vmem:[#allocation2 + $0x1b0] sm:$0xff] %v2522
    %2601 = vst [vmem:[#allocation2 + $0x1b8] sm:$0xff] %v2524
    %2602 = vst [vmem:[#allocation2 + $0x1c0] sm:$0xff] %v2528
    %2603 = vst [vmem:[#allocation2 + $0x1c8] sm:$0xff] %v2530
    %2604 = vst [vmem:[#allocation2 + $0x1d0] sm:$0xff] %v2532
    %2605 = vst [vmem:[#allocation2 + $0x1d8] sm:$0xff] %v2534
    %2606 = vst [vmem:[#allocation2 + $0x1e0] sm:$0xff] %v2538
    %2607 = vst [vmem:[#allocation2 + $0x1e8] sm:$0xff] %v2540
    %2608 = vst [vmem:[#allocation2 + $0x1f0] sm:$0xff] %v2542
    %2609 = vst [vmem:[#allocation2 + $0x1f8] sm:$0xff] %v2544
    // Predicated region
    $region42: #{tpu_custom_call.1} parent=1 // pred_check
      _
    $region43: #{tpu_custom_call.1} parent=1 // pred_check_branch
      %2611 = sbr.rel (0) target = $region45
    $region44: #{tpu_custom_call.1} parent=1 // pred_region
      _
    $region45: #{tpu_custom_call.1} parent=1 // pred_fallthru
      _
    // Predicated region
    $region46: #{tpu_custom_call.1} parent=1 // pred_check
      _
    $region47: #{tpu_custom_call.1} parent=1 // pred_check_branch
      %2613 = sbr.rel (0) target = $region49
    $region48: #{tpu_custom_call.1} parent=1 // pred_region
      %s2615 = ssub.s32 8192, 8192
      %2616 = vsyncadd [#allocation3], %s2615
      %s2617 = sshll.u32 [#allocation2], 4
      %s2618 = int_to_ptr.vmem [resolvable:$true] %s2617
      %2623 = dma.vmem_to_hbm [thread:$0]  %s2618, 8192, %s11, [#allocation3], 256, 256, 16
    $region49: #{tpu_custom_call.1} parent=1 // pred_fallthru
      _
    // Predicated region
    $region50: #{tpu_custom_call.1} parent=1 // pred_check
      _
    $region51: #{tpu_custom_call.1} parent=1 // pred_check_branch
      %2625 = sbr.rel (0) target = $region53
    $region52: #{tpu_custom_call.1} parent=1 // pred_region
      _
    $region53: #{tpu_custom_call.1} parent=1 // pred_fallthru
      _
    // Predicated region
    $region54: #{tpu_custom_call.1} parent=1 // pred_check
      _
    $region55: #{tpu_custom_call.1} parent=1 // pred_check_branch
      %2627 = sbr.rel (0) target = $region57
    $region56: #{tpu_custom_call.1} parent=1 // pred_region
      %2628 = dma.done [#allocation3], 8192
    $region57: #{tpu_custom_call.1} parent=1 // pred_fallthru
      _
    %2629 = vsyncpa [#allocation3], 1

</llo_original>
